<compile_context>
chip_gen: v5e
topology: v5e:2x2
jax: 0.10.0
libtpu: 0.0.40
codegen_flags: <defaults>
</compile_context>

<pallas_src>
import functools

import jax
import jax.numpy as jnp
from jax import lax
from jax.experimental import pallas as pl
from jax.experimental.pallas import tpu as pltpu

D_MODEL = 64
N_HEADS = 4
HEAD_DIM = D_MODEL // N_HEADS
DIM_FF = 128
N_LAYERS = 2
LN_EPS = 1e-5


def _layernorm(x, gamma, beta):
    """PyTorch LayerNorm: biased variance, eps inside rsqrt. f32 throughout."""
    mu = jnp.mean(x, axis=-1, keepdims=True)
    xc = x - mu
    var = jnp.mean(xc * xc, axis=-1, keepdims=True)
    inv = lax.rsqrt(var + LN_EPS)
    return xc * inv * gamma + beta


def transformer_kernel(x_ref, emb_w_ref, emb_b_ref,
                       wqkv_ref, bqkv_ref, ow_ref, ob_ref,
                       l1w_ref, l1b_ref, l2w_ref, l2b_ref,
                       ln1w_ref, ln1b_ref, ln2w_ref, ln2b_ref,
                       fcw_ref, fcb_ref, o_ref, *, n_valid):
    f32 = jnp.float32
    bf16 = jnp.bfloat16
    S = x_ref.shape[0]                      # padded sequence length (== batch B)
    scale = 1.0 / (HEAD_DIM ** 0.5)

    # Embedding: [S, F] @ [F, D] + b  (bf16 operands, f32 accumulation).
    h = jnp.dot(x_ref[...].astype(bf16), emb_w_ref[...],
                preferred_element_type=f32) + emb_b_ref[...]

    # Static key mask for padded rows; not traced when no padding is present.
    if n_valid < S:
        key_mask = lax.broadcasted_iota(jnp.int32, (1, 1, S), 2) < n_valid
    else:
        key_mask = None

    for l in range(N_LAYERS):
        # Per-layer, per-head weights (pre-arranged in the wrapper, bf16):
        #   wqkv: [H, D, 3*Dh]  columns ordered [q | k | v] per head
        #   ow  : [H, Dh, D]    out_proj rows split per head
        wqkv = wqkv_ref[l * N_HEADS:(l + 1) * N_HEADS]
        bqkv = bqkv_ref[l * N_HEADS:(l + 1) * N_HEADS]      # [H, 1, 3*Dh] f32
        ow = ow_ref[l * N_HEADS:(l + 1) * N_HEADS]
        ob = ob_ref[l]                                      # [1, D] f32

        # Fused, head-batched QKV projection: [H, S, D] x [H, D, 3*Dh] -> [H, S, 3*Dh]
        hb = jnp.broadcast_to(h.astype(bf16), (N_HEADS, S, D_MODEL))
        qkv = lax.dot_general(hb, wqkv, (((2,), (1,)), ((0,), (0,))),
                              preferred_element_type=f32) + bqkv
        q = qkv[:, :, 0:HEAD_DIM] * scale                   # [H, S, Dh]
        k = qkv[:, :, HEAD_DIM:2 * HEAD_DIM]                # [H, S, Dh]
        v = qkv[:, :, 2 * HEAD_DIM:3 * HEAD_DIM]            # [H, S, Dh]

        # Scores for all heads in one batched matmul: [H, S, S] (f32 accum).
        s = lax.dot_general(q.astype(bf16), k.astype(bf16),
                            (((2,), (2,)), ((0,), (0,))),
                            preferred_element_type=f32)
        if key_mask is not None:
            s = jnp.where(key_mask, s, -1e30)

        # Max-stabilized softmax; reciprocal goes to the EUP slot.
        m = jnp.max(s, axis=-1, keepdims=True)
        e = jnp.exp(s - m)
        p = e * pl.reciprocal(jnp.sum(e, axis=-1, keepdims=True), approx=True)

        # P @ V for all heads: [H, S, Dh]
        ctx = lax.dot_general(p.astype(bf16), v.astype(bf16),
                              (((2,), (1,)), ((0,), (0,))),
                              preferred_element_type=f32)

        # Head merge folded into the out-projection: [H, S, Dh] x [H, Dh, D]
        # -> [H, S, D], then sum over heads (no lane-axis concatenate).
        attn = lax.dot_general(ctx.astype(bf16), ow,
                               (((2,), (1,)), ((0,), (0,))),
                               preferred_element_type=f32)
        attn = jnp.sum(attn, axis=0) + ob                   # [S, D]

        # Post-norm residual block 1 (dropout is identity in eval).
        h = _layernorm(h + attn, ln1w_ref[l], ln1b_ref[l])

        # Feed-forward (bf16 matmuls, f32 accumulation, f32 elementwise).
        ff = jnp.dot(h.astype(bf16), l1w_ref[l],
                     preferred_element_type=f32) + l1b_ref[l]
        ff = jnp.maximum(ff, 0.0)                           # relu
        ff = jnp.dot(ff.astype(bf16), l2w_ref[l],
                     preferred_element_type=f32) + l2b_ref[l]

        # Post-norm residual block 2.
        h = _layernorm(h + ff, ln2w_ref[l], ln2b_ref[l])

    # x.mean(dim=1) over the singleton batch dim is the identity.
    # Final head on the VPU: broadcast-multiply + lane reduction instead of an
    # N=1 MXU push.  fcw is the [1, D] weight row.
    o_ref[...] = jnp.sum(h * fcw_ref[...], axis=-1, keepdims=True) + fcb_ref[...]


def make_params(key, input_size):
    """Random params in the transposed ([in, out]) layout of the PyTorch module."""
    ks = jax.random.split(key, 12)
    init = lambda k, shape: jax.random.normal(k, shape, jnp.float32) * 0.05
    return dict(
        emb_w=init(ks[0], (input_size, D_MODEL)),            # embedding.weight.T
        emb_b=init(ks[1], (1, D_MODEL)),
        in_w=init(ks[2], (N_LAYERS, D_MODEL, 3 * D_MODEL)),   # in_proj_weight.T (q|k|v cols)
        in_b=init(ks[3], (N_LAYERS, 1, 3 * D_MODEL)),
        out_w=init(ks[4], (N_LAYERS, D_MODEL, D_MODEL)),      # out_proj.weight.T
        out_b=init(ks[5], (N_LAYERS, 1, D_MODEL)),
        l1_w=init(ks[6], (N_LAYERS, D_MODEL, DIM_FF)),        # linear1.weight.T
        l1_b=init(ks[7], (N_LAYERS, 1, DIM_FF)),
        l2_w=init(ks[8], (N_LAYERS, DIM_FF, D_MODEL)),        # linear2.weight.T
        l2_b=init(ks[9], (N_LAYERS, 1, D_MODEL)),
        ln1_w=jnp.ones((N_LAYERS, 1, D_MODEL), jnp.float32),
        ln1_b=jnp.zeros((N_LAYERS, 1, D_MODEL), jnp.float32),
        ln2_w=jnp.ones((N_LAYERS, 1, D_MODEL), jnp.float32),
        ln2_b=jnp.zeros((N_LAYERS, 1, D_MODEL), jnp.float32),
        fc_w=init(ks[10], (D_MODEL, 1)),                      # fc.weight.T
        fc_b=init(ks[11], (1, 1)),
    )


def pack_params(p):
    """Rearrange weights into the kernel's per-head fused layout and cast MXU
    operands to bf16 (biases / LN params / fc stay f32)."""
    bf16 = jnp.bfloat16
    L, D, H, Dh = N_LAYERS, D_MODEL, N_HEADS, HEAD_DIM

    # in_proj columns are [q | k | v], each block head-major with Dh per head.
    # -> per-(layer, head) fused weight [D, 3*Dh] with column order [q_h | k_h | v_h].
    in_w = p["in_w"].reshape(L, D, 3, H, Dh)
    wqkv = jnp.transpose(in_w, (0, 3, 1, 2, 4)).reshape(L * H, D, 3 * Dh)
    in_b = p["in_b"].reshape(L, 1, 3, H, Dh)
    bqkv = jnp.transpose(in_b, (0, 3, 1, 2, 4)).reshape(L * H, 1, 3 * Dh)

    # out_proj.weight.T rows are head-major -> per-(layer, head) [Dh, D].
    ow = p["out_w"].reshape(L, H, Dh, D).reshape(L * H, Dh, D)

    return dict(
        emb_w=p["emb_w"].astype(bf16), emb_b=p["emb_b"],
        wqkv=wqkv.astype(bf16), bqkv=bqkv,
        ow=ow.astype(bf16), ob=p["out_b"],
        l1_w=p["l1_w"].astype(bf16), l1_b=p["l1_b"],
        l2_w=p["l2_w"].astype(bf16), l2_b=p["l2_b"],
        ln1_w=p["ln1_w"], ln1_b=p["ln1_b"],
        ln2_w=p["ln2_w"], ln2_b=p["ln2_b"],
        fc_w=p["fc_w"].reshape(1, D),      # weight row for VPU broadcast-multiply
        fc_b=p["fc_b"],
    )


def transformer_forward(x, params):
    """x: [B, input_size] f32  ->  [B, 1] f32 (matches TransformerModel.forward)."""
    S = x.shape[0]
    S_pad = max(8, ((S + 7) // 8) * 8)     # sublane-align the sequence (= batch) axis
    if S_pad != S:
        x = jnp.pad(x, ((0, S_pad - S), (0, 0)))

    pk = pack_params(params)
    args = (x,
            pk["emb_w"], pk["emb_b"],
            pk["wqkv"], pk["bqkv"], pk["ow"], pk["ob"],
            pk["l1_w"], pk["l1_b"], pk["l2_w"], pk["l2_b"],
            pk["ln1_w"], pk["ln1_b"], pk["ln2_w"], pk["ln2_b"],
            pk["fc_w"], pk["fc_b"])

    vmem = pl.BlockSpec(memory_space=pltpu.MemorySpace.VMEM)
    out = pl.pallas_call(
        functools.partial(transformer_kernel, n_valid=S),
        out_shape=jax.ShapeDtypeStruct((S_pad, 1), jnp.float32),
        in_specs=[vmem] * len(args),
        out_specs=vmem,
    )(*args)
    return out[:S]


if __name__ == "__main__":
    key = jax.random.PRNGKey(0)
    k_x, k_p = jax.random.split(key)

    batch = 8            # becomes the "sequence" axis inside the transformer
    input_size = 16

    x = jax.random.normal(k_x, (batch, input_size), jnp.float32)
    params = make_params(k_p, input_size)

    out = transformer_forward(x, params)
    out = jax.block_until_ready(out)
    assert out.shape == (batch, 1), out.shape
    assert bool(jnp.all(jnp.isfinite(out)))
    print("KERNEL_OK")
</pallas_src>

<mosaic_0001>
module attributes {stable_mosaic.version = 11 : i64} {
  func.func @transformer_kernel(%arg0: memref<8x16xf32, #tpu.memory_space<vmem>>, %arg1: memref<16x64xbf16, #tpu.memory_space<vmem>>, %arg2: memref<1x64xf32, #tpu.memory_space<vmem>>, %arg3: memref<8x64x48xbf16, #tpu.memory_space<vmem>>, %arg4: memref<8x1x48xf32, #tpu.memory_space<vmem>>, %arg5: memref<8x16x64xbf16, #tpu.memory_space<vmem>>, %arg6: memref<2x1x64xf32, #tpu.memory_space<vmem>>, %arg7: memref<2x64x128xbf16, #tpu.memory_space<vmem>>, %arg8: memref<2x1x128xf32, #tpu.memory_space<vmem>>, %arg9: memref<2x128x64xbf16, #tpu.memory_space<vmem>>, %arg10: memref<2x1x64xf32, #tpu.memory_space<vmem>>, %arg11: memref<2x1x64xf32, #tpu.memory_space<vmem>>, %arg12: memref<2x1x64xf32, #tpu.memory_space<vmem>>, %arg13: memref<2x1x64xf32, #tpu.memory_space<vmem>>, %arg14: memref<2x1x64xf32, #tpu.memory_space<vmem>>, %arg15: memref<1x64xf32, #tpu.memory_space<vmem>>, %arg16: memref<1x1xf32, #tpu.memory_space<vmem>>, %arg17: memref<8x1xf32, #tpu.memory_space<vmem>>) attributes {dimension_semantics = [], scalar_prefetch = 0 : i64, scratch_operands = 0 : i64, tpu.core_type = #tpu.core_type<tc>} {
    %c0 = arith.constant 0 : index
    %c0_0 = arith.constant 0 : index
    %0 = vector.load %arg0[%c0, %c0_0] : memref<8x16xf32, #tpu.memory_space<vmem>>, vector<8x16xf32>
    %1 = arith.truncf %0 : vector<8x16xf32> to vector<8x16xbf16>
    %c0_1 = arith.constant 0 : index
    %c0_2 = arith.constant 0 : index
    %2 = vector.load %arg1[%c0_1, %c0_2] : memref<16x64xbf16, #tpu.memory_space<vmem>>, vector<16x64xbf16>
    %cst = arith.constant dense<0.000000e+00> : vector<8x64xf32>
    %3 = tpu.matmul %1, %2, %cst {dimension_numbers = #tpu.dot_dimension_numbers<[1], [0], [0], [1], [0, 0, 1, 1], [], []>} : vector<8x16xbf16>, vector<16x64xbf16>, vector<8x64xf32> -> vector<8x64xf32>
    %c0_3 = arith.constant 0 : index
    %c0_4 = arith.constant 0 : index
    %4 = vector.load %arg2[%c0_3, %c0_4] : memref<1x64xf32, #tpu.memory_space<vmem>>, vector<1x64xf32>
    %5 = vector.broadcast %4 : vector<1x64xf32> to vector<8x64xf32>
    %6 = arith.addf %3, %5 : vector<8x64xf32>
    %c0_5 = arith.constant 0 : index
    %c0_6 = arith.constant 0 : index
    %c0_7 = arith.constant 0 : index
    %7 = vector.load %arg3[%c0_5, %c0_6, %c0_7] : memref<8x64x48xbf16, #tpu.memory_space<vmem>>, vector<4x64x48xbf16>
    %c0_8 = arith.constant 0 : index
    %c0_9 = arith.constant 0 : index
    %c0_10 = arith.constant 0 : index
    %8 = vector.load %arg4[%c0_8, %c0_9, %c0_10] : memref<8x1x48xf32, #tpu.memory_space<vmem>>, vector<4x1x48xf32>
    %c0_11 = arith.constant 0 : index
    %c0_12 = arith.constant 0 : index
    %c0_13 = arith.constant 0 : index
    %9 = vector.load %arg5[%c0_11, %c0_12, %c0_13] : memref<8x16x64xbf16, #tpu.memory_space<vmem>>, vector<4x16x64xbf16>
    %c0_14 = arith.constant 0 : index
    %c0_15 = arith.constant 0 : index
    %c0_16 = arith.constant 0 : index
    %10 = vector.load %arg6[%c0_14, %c0_15, %c0_16] : memref<2x1x64xf32, #tpu.memory_space<vmem>>, vector<1x1x64xf32>
    %11 = vector.shape_cast %10 : vector<1x1x64xf32> to vector<1x64xf32>
    %12 = arith.truncf %6 : vector<8x64xf32> to vector<8x64xbf16>
    %13 = vector.shape_cast %12 : vector<8x64xbf16> to vector<1x8x64xbf16>
    %14 = vector.broadcast %13 : vector<1x8x64xbf16> to vector<4x8x64xbf16>
    %cst_17 = arith.constant dense<0.000000e+00> : vector<4x8x48xf32>
    %15 = tpu.matmul %14, %7, %cst_17 {dimension_numbers = #tpu.dot_dimension_numbers<[2], [1], [1], [2], [0, 0, 0, 1, 1, 2], [0], [0]>} : vector<4x8x64xbf16>, vector<4x64x48xbf16>, vector<4x8x48xf32> -> vector<4x8x48xf32>
    %16 = vector.broadcast %8 : vector<4x1x48xf32> to vector<4x8x48xf32>
    %17 = arith.addf %15, %16 : vector<4x8x48xf32>
    %18 = vector.extract_strided_slice %17 {offsets = [0, 0, 0], sizes = [4, 8, 16], strides = [1, 1, 1]} : vector<4x8x48xf32> to vector<4x8x16xf32>
    %cst_18 = arith.constant 2.500000e-01 : f32
    %19 = vector.broadcast %cst_18 : f32 to vector<4x8x16xf32>
    %20 = arith.mulf %18, %19 : vector<4x8x16xf32>
    %21 = vector.extract_strided_slice %17 {offsets = [0, 0, 16], sizes = [4, 8, 16], strides = [1, 1, 1]} : vector<4x8x48xf32> to vector<4x8x16xf32>
    %22 = vector.extract_strided_slice %17 {offsets = [0, 0, 32], sizes = [4, 8, 16], strides = [1, 1, 1]} : vector<4x8x48xf32> to vector<4x8x16xf32>
    %23 = arith.truncf %20 : vector<4x8x16xf32> to vector<4x8x16xbf16>
    %24 = arith.truncf %21 : vector<4x8x16xf32> to vector<4x8x16xbf16>
    %cst_19 = arith.constant dense<0.000000e+00> : vector<4x8x8xf32>
    %25 = tpu.matmul %23, %24, %cst_19 {dimension_numbers = #tpu.dot_dimension_numbers<[2], [2], [1], [1], [0, 0, 0, 1, 1, 1], [0], [0]>} : vector<4x8x16xbf16>, vector<4x8x16xbf16>, vector<4x8x8xf32> -> vector<4x8x8xf32>
    %cst_20 = arith.constant dense<0xFF800000> : vector<4x8xf32>
    %26 = vector.multi_reduction <maximumf>, %25, %cst_20 [2] : vector<4x8x8xf32> to vector<4x8xf32>
    %27 = vector.shape_cast %26 : vector<4x8xf32> to vector<4x8x1xf32>
    %28 = vector.broadcast %27 : vector<4x8x1xf32> to vector<4x8x8xf32>
    %29 = arith.subf %25, %28 : vector<4x8x8xf32>
    %30 = math.exp %29 : vector<4x8x8xf32>
    %cst_21 = arith.constant dense<0.000000e+00> : vector<4x8xf32>
    %31 = vector.multi_reduction <add>, %30, %cst_21 [2] : vector<4x8x8xf32> to vector<4x8xf32>
    %32 = vector.shape_cast %31 : vector<4x8xf32> to vector<4x8x1xf32>
    %33 = tpu.reciprocal %32 {approx = true} : vector<4x8x1xf32> -> vector<4x8x1xf32>
    %34 = vector.broadcast %33 : vector<4x8x1xf32> to vector<4x8x8xf32>
    %35 = arith.mulf %30, %34 : vector<4x8x8xf32>
    %36 = arith.truncf %35 : vector<4x8x8xf32> to vector<4x8x8xbf16>
    %37 = arith.truncf %22 : vector<4x8x16xf32> to vector<4x8x16xbf16>
    %cst_22 = arith.constant dense<0.000000e+00> : vector<4x8x16xf32>
    %38 = tpu.matmul %36, %37, %cst_22 {dimension_numbers = #tpu.dot_dimension_numbers<[2], [1], [1], [2], [0, 0, 0, 1, 1, 2], [0], [0]>} : vector<4x8x8xbf16>, vector<4x8x16xbf16>, vector<4x8x16xf32> -> vector<4x8x16xf32>
    %39 = arith.truncf %38 : vector<4x8x16xf32> to vector<4x8x16xbf16>
    %cst_23 = arith.constant dense<0.000000e+00> : vector<4x8x64xf32>
    %40 = tpu.matmul %39, %9, %cst_23 {dimension_numbers = #tpu.dot_dimension_numbers<[2], [1], [1], [2], [0, 0, 0, 1, 1, 2], [0], [0]>} : vector<4x8x16xbf16>, vector<4x16x64xbf16>, vector<4x8x64xf32> -> vector<4x8x64xf32>
    %cst_24 = arith.constant dense<0.000000e+00> : vector<8x64xf32>
    %41 = vector.multi_reduction <add>, %40, %cst_24 [0] : vector<4x8x64xf32> to vector<8x64xf32>
    %42 = vector.broadcast %11 : vector<1x64xf32> to vector<8x64xf32>
    %43 = arith.addf %41, %42 : vector<8x64xf32>
    %44 = arith.addf %6, %43 : vector<8x64xf32>
    %c0_25 = arith.constant 0 : index
    %c0_26 = arith.constant 0 : index
    %c0_27 = arith.constant 0 : index
    %45 = vector.load %arg11[%c0_25, %c0_26, %c0_27] : memref<2x1x64xf32, #tpu.memory_space<vmem>>, vector<1x1x64xf32>
    %46 = vector.shape_cast %45 : vector<1x1x64xf32> to vector<1x64xf32>
    %c0_28 = arith.constant 0 : index
    %c0_29 = arith.constant 0 : index
    %c0_30 = arith.constant 0 : index
    %47 = vector.load %arg12[%c0_28, %c0_29, %c0_30] : memref<2x1x64xf32, #tpu.memory_space<vmem>>, vector<1x1x64xf32>
    %48 = vector.shape_cast %47 : vector<1x1x64xf32> to vector<1x64xf32>
    %cst_31 = arith.constant dense<0.000000e+00> : vector<8xf32>
    %49 = vector.multi_reduction <add>, %44, %cst_31 [1] : vector<8x64xf32> to vector<8xf32>
    %50 = vector.shape_cast %49 : vector<8xf32> to vector<8x1xf32>
    %cst_32 = arith.constant 6.400000e+01 : f32
    %51 = vector.broadcast %cst_32 : f32 to vector<8x1xf32>
    %52 = arith.divf %50, %51 : vector<8x1xf32>
    %53 = vector.broadcast %52 : vector<8x1xf32> to vector<8x64xf32>
    %54 = arith.subf %44, %53 : vector<8x64xf32>
    %55 = arith.mulf %54, %54 : vector<8x64xf32>
    %cst_33 = arith.constant dense<0.000000e+00> : vector<8xf32>
    %56 = vector.multi_reduction <add>, %55, %cst_33 [1] : vector<8x64xf32> to vector<8xf32>
    %57 = vector.shape_cast %56 : vector<8xf32> to vector<8x1xf32>
    %cst_34 = arith.constant 6.400000e+01 : f32
    %58 = vector.broadcast %cst_34 : f32 to vector<8x1xf32>
    %59 = arith.divf %57, %58 : vector<8x1xf32>
    %cst_35 = arith.constant 9.99999974E-6 : f32
    %60 = vector.broadcast %cst_35 : f32 to vector<8x1xf32>
    %61 = arith.addf %59, %60 : vector<8x1xf32>
    %62 = math.rsqrt %61 : vector<8x1xf32>
    %63 = vector.broadcast %62 : vector<8x1xf32> to vector<8x64xf32>
    %64 = arith.mulf %54, %63 : vector<8x64xf32>
    %65 = vector.broadcast %46 : vector<1x64xf32> to vector<8x64xf32>
    %66 = arith.mulf %64, %65 : vector<8x64xf32>
    %67 = vector.broadcast %48 : vector<1x64xf32> to vector<8x64xf32>
    %68 = arith.addf %66, %67 : vector<8x64xf32>
    %69 = arith.truncf %68 : vector<8x64xf32> to vector<8x64xbf16>
    %c0_36 = arith.constant 0 : index
    %c0_37 = arith.constant 0 : index
    %c0_38 = arith.constant 0 : index
    %70 = vector.load %arg7[%c0_36, %c0_37, %c0_38] : memref<2x64x128xbf16, #tpu.memory_space<vmem>>, vector<1x64x128xbf16>
    %71 = vector.shape_cast %70 : vector<1x64x128xbf16> to vector<64x128xbf16>
    %cst_39 = arith.constant dense<0.000000e+00> : vector<8x128xf32>
    %72 = tpu.matmul %69, %71, %cst_39 {dimension_numbers = #tpu.dot_dimension_numbers<[1], [0], [0], [1], [0, 0, 1, 1], [], []>} : vector<8x64xbf16>, vector<64x128xbf16>, vector<8x128xf32> -> vector<8x128xf32>
    %c0_40 = arith.constant 0 : index
    %c0_41 = arith.constant 0 : index
    %c0_42 = arith.constant 0 : index
    %73 = vector.load %arg8[%c0_40, %c0_41, %c0_42] : memref<2x1x128xf32, #tpu.memory_space<vmem>>, vector<1x1x128xf32>
    %74 = vector.shape_cast %73 : vector<1x1x128xf32> to vector<1x128xf32>
    %75 = vector.broadcast %74 : vector<1x128xf32> to vector<8x128xf32>
    %76 = arith.addf %72, %75 : vector<8x128xf32>
    %cst_43 = arith.constant 0.000000e+00 : f32
    %77 = vector.broadcast %cst_43 : f32 to vector<8x128xf32>
    %78 = arith.maximumf %76, %77 : vector<8x128xf32>
    %79 = arith.truncf %78 : vector<8x128xf32> to vector<8x128xbf16>
    %c0_44 = arith.constant 0 : index
    %c0_45 = arith.constant 0 : index
    %c0_46 = arith.constant 0 : index
    %80 = vector.load %arg9[%c0_44, %c0_45, %c0_46] : memref<2x128x64xbf16, #tpu.memory_space<vmem>>, vector<1x128x64xbf16>
    %81 = vector.shape_cast %80 : vector<1x128x64xbf16> to vector<128x64xbf16>
    %cst_47 = arith.constant dense<0.000000e+00> : vector<8x64xf32>
    %82 = tpu.matmul %79, %81, %cst_47 {dimension_numbers = #tpu.dot_dimension_numbers<[1], [0], [0], [1], [0, 0, 1, 1], [], []>} : vector<8x128xbf16>, vector<128x64xbf16>, vector<8x64xf32> -> vector<8x64xf32>
    %c0_48 = arith.constant 0 : index
    %c0_49 = arith.constant 0 : index
    %c0_50 = arith.constant 0 : index
    %83 = vector.load %arg10[%c0_48, %c0_49, %c0_50] : memref<2x1x64xf32, #tpu.memory_space<vmem>>, vector<1x1x64xf32>
    %84 = vector.shape_cast %83 : vector<1x1x64xf32> to vector<1x64xf32>
    %85 = vector.broadcast %84 : vector<1x64xf32> to vector<8x64xf32>
    %86 = arith.addf %82, %85 : vector<8x64xf32>
    %87 = arith.addf %68, %86 : vector<8x64xf32>
    %c0_51 = arith.constant 0 : index
    %c0_52 = arith.constant 0 : index
    %c0_53 = arith.constant 0 : index
    %88 = vector.load %arg13[%c0_51, %c0_52, %c0_53] : memref<2x1x64xf32, #tpu.memory_space<vmem>>, vector<1x1x64xf32>
    %89 = vector.shape_cast %88 : vector<1x1x64xf32> to vector<1x64xf32>
    %c0_54 = arith.constant 0 : index
    %c0_55 = arith.constant 0 : index
    %c0_56 = arith.constant 0 : index
    %90 = vector.load %arg14[%c0_54, %c0_55, %c0_56] : memref<2x1x64xf32, #tpu.memory_space<vmem>>, vector<1x1x64xf32>
    %91 = vector.shape_cast %90 : vector<1x1x64xf32> to vector<1x64xf32>
    %cst_57 = arith.constant dense<0.000000e+00> : vector<8xf32>
    %92 = vector.multi_reduction <add>, %87, %cst_57 [1] : vector<8x64xf32> to vector<8xf32>
    %93 = vector.shape_cast %92 : vector<8xf32> to vector<8x1xf32>
    %cst_58 = arith.constant 6.400000e+01 : f32
    %94 = vector.broadcast %cst_58 : f32 to vector<8x1xf32>
    %95 = arith.divf %93, %94 : vector<8x1xf32>
    %96 = vector.broadcast %95 : vector<8x1xf32> to vector<8x64xf32>
    %97 = arith.subf %87, %96 : vector<8x64xf32>
    %98 = arith.mulf %97, %97 : vector<8x64xf32>
    %cst_59 = arith.constant dense<0.000000e+00> : vector<8xf32>
    %99 = vector.multi_reduction <add>, %98, %cst_59 [1] : vector<8x64xf32> to vector<8xf32>
    %100 = vector.shape_cast %99 : vector<8xf32> to vector<8x1xf32>
    %cst_60 = arith.constant 6.400000e+01 : f32
    %101 = vector.broadcast %cst_60 : f32 to vector<8x1xf32>
    %102 = arith.divf %100, %101 : vector<8x1xf32>
    %cst_61 = arith.constant 9.99999974E-6 : f32
    %103 = vector.broadcast %cst_61 : f32 to vector<8x1xf32>
    %104 = arith.addf %102, %103 : vector<8x1xf32>
    %105 = math.rsqrt %104 : vector<8x1xf32>
    %106 = vector.broadcast %105 : vector<8x1xf32> to vector<8x64xf32>
    %107 = arith.mulf %97, %106 : vector<8x64xf32>
    %108 = vector.broadcast %89 : vector<1x64xf32> to vector<8x64xf32>
    %109 = arith.mulf %107, %108 : vector<8x64xf32>
    %110 = vector.broadcast %91 : vector<1x64xf32> to vector<8x64xf32>
    %111 = arith.addf %109, %110 : vector<8x64xf32>
    %c4 = arith.constant 4 : index
    %c0_62 = arith.constant 0 : index
    %c0_63 = arith.constant 0 : index
    %112 = vector.load %arg3[%c4, %c0_62, %c0_63] : memref<8x64x48xbf16, #tpu.memory_space<vmem>>, vector<4x64x48xbf16>
    %c4_64 = arith.constant 4 : index
    %c0_65 = arith.constant 0 : index
    %c0_66 = arith.constant 0 : index
    %113 = vector.load %arg4[%c4_64, %c0_65, %c0_66] : memref<8x1x48xf32, #tpu.memory_space<vmem>>, vector<4x1x48xf32>
    %c4_67 = arith.constant 4 : index
    %c0_68 = arith.constant 0 : index
    %c0_69 = arith.constant 0 : index
    %114 = vector.load %arg5[%c4_67, %c0_68, %c0_69] : memref<8x16x64xbf16, #tpu.memory_space<vmem>>, vector<4x16x64xbf16>
    %c1 = arith.constant 1 : index
    %c0_70 = arith.constant 0 : index
    %c0_71 = arith.constant 0 : index
    %115 = vector.load %arg6[%c1, %c0_70, %c0_71] : memref<2x1x64xf32, #tpu.memory_space<vmem>>, vector<1x1x64xf32>
    %116 = vector.shape_cast %115 : vector<1x1x64xf32> to vector<1x64xf32>
    %117 = arith.truncf %111 : vector<8x64xf32> to vector<8x64xbf16>
    %118 = vector.shape_cast %117 : vector<8x64xbf16> to vector<1x8x64xbf16>
    %119 = vector.broadcast %118 : vector<1x8x64xbf16> to vector<4x8x64xbf16>
    %cst_72 = arith.constant dense<0.000000e+00> : vector<4x8x48xf32>
    %120 = tpu.matmul %119, %112, %cst_72 {dimension_numbers = #tpu.dot_dimension_numbers<[2], [1], [1], [2], [0, 0, 0, 1, 1, 2], [0], [0]>} : vector<4x8x64xbf16>, vector<4x64x48xbf16>, vector<4x8x48xf32> -> vector<4x8x48xf32>
    %121 = vector.broadcast %113 : vector<4x1x48xf32> to vector<4x8x48xf32>
    %122 = arith.addf %120, %121 : vector<4x8x48xf32>
    %123 = vector.extract_strided_slice %122 {offsets = [0, 0, 0], sizes = [4, 8, 16], strides = [1, 1, 1]} : vector<4x8x48xf32> to vector<4x8x16xf32>
    %cst_73 = arith.constant 2.500000e-01 : f32
    %124 = vector.broadcast %cst_73 : f32 to vector<4x8x16xf32>
    %125 = arith.mulf %123, %124 : vector<4x8x16xf32>
    %126 = vector.extract_strided_slice %122 {offsets = [0, 0, 16], sizes = [4, 8, 16], strides = [1, 1, 1]} : vector<4x8x48xf32> to vector<4x8x16xf32>
    %127 = vector.extract_strided_slice %122 {offsets = [0, 0, 32], sizes = [4, 8, 16], strides = [1, 1, 1]} : vector<4x8x48xf32> to vector<4x8x16xf32>
    %128 = arith.truncf %125 : vector<4x8x16xf32> to vector<4x8x16xbf16>
    %129 = arith.truncf %126 : vector<4x8x16xf32> to vector<4x8x16xbf16>
    %cst_74 = arith.constant dense<0.000000e+00> : vector<4x8x8xf32>
    %130 = tpu.matmul %128, %129, %cst_74 {dimension_numbers = #tpu.dot_dimension_numbers<[2], [2], [1], [1], [0, 0, 0, 1, 1, 1], [0], [0]>} : vector<4x8x16xbf16>, vector<4x8x16xbf16>, vector<4x8x8xf32> -> vector<4x8x8xf32>
    %cst_75 = arith.constant dense<0xFF800000> : vector<4x8xf32>
    %131 = vector.multi_reduction <maximumf>, %130, %cst_75 [2] : vector<4x8x8xf32> to vector<4x8xf32>
    %132 = vector.shape_cast %131 : vector<4x8xf32> to vector<4x8x1xf32>
    %133 = vector.broadcast %132 : vector<4x8x1xf32> to vector<4x8x8xf32>
    %134 = arith.subf %130, %133 : vector<4x8x8xf32>
    %135 = math.exp %134 : vector<4x8x8xf32>
    %cst_76 = arith.constant dense<0.000000e+00> : vector<4x8xf32>
    %136 = vector.multi_reduction <add>, %135, %cst_76 [2] : vector<4x8x8xf32> to vector<4x8xf32>
    %137 = vector.shape_cast %136 : vector<4x8xf32> to vector<4x8x1xf32>
    %138 = tpu.reciprocal %137 {approx = true} : vector<4x8x1xf32> -> vector<4x8x1xf32>
    %139 = vector.broadcast %138 : vector<4x8x1xf32> to vector<4x8x8xf32>
    %140 = arith.mulf %135, %139 : vector<4x8x8xf32>
    %141 = arith.truncf %140 : vector<4x8x8xf32> to vector<4x8x8xbf16>
    %142 = arith.truncf %127 : vector<4x8x16xf32> to vector<4x8x16xbf16>
    %cst_77 = arith.constant dense<0.000000e+00> : vector<4x8x16xf32>
    %143 = tpu.matmul %141, %142, %cst_77 {dimension_numbers = #tpu.dot_dimension_numbers<[2], [1], [1], [2], [0, 0, 0, 1, 1, 2], [0], [0]>} : vector<4x8x8xbf16>, vector<4x8x16xbf16>, vector<4x8x16xf32> -> vector<4x8x16xf32>
    %144 = arith.truncf %143 : vector<4x8x16xf32> to vector<4x8x16xbf16>
    %cst_78 = arith.constant dense<0.000000e+00> : vector<4x8x64xf32>
    %145 = tpu.matmul %144, %114, %cst_78 {dimension_numbers = #tpu.dot_dimension_numbers<[2], [1], [1], [2], [0, 0, 0, 1, 1, 2], [0], [0]>} : vector<4x8x16xbf16>, vector<4x16x64xbf16>, vector<4x8x64xf32> -> vector<4x8x64xf32>
    %cst_79 = arith.constant dense<0.000000e+00> : vector<8x64xf32>
    %146 = vector.multi_reduction <add>, %145, %cst_79 [0] : vector<4x8x64xf32> to vector<8x64xf32>
    %147 = vector.broadcast %116 : vector<1x64xf32> to vector<8x64xf32>
    %148 = arith.addf %146, %147 : vector<8x64xf32>
    %149 = arith.addf %111, %148 : vector<8x64xf32>
    %c1_80 = arith.constant 1 : index
    %c0_81 = arith.constant 0 : index
    %c0_82 = arith.constant 0 : index
    %150 = vector.load %arg11[%c1_80, %c0_81, %c0_82] : memref<2x1x64xf32, #tpu.memory_space<vmem>>, vector<1x1x64xf32>
    %151 = vector.shape_cast %150 : vector<1x1x64xf32> to vector<1x64xf32>
    %c1_83 = arith.constant 1 : index
    %c0_84 = arith.constant 0 : index
    %c0_85 = arith.constant 0 : index
    %152 = vector.load %arg12[%c1_83, %c0_84, %c0_85] : memref<2x1x64xf32, #tpu.memory_space<vmem>>, vector<1x1x64xf32>
    %153 = vector.shape_cast %152 : vector<1x1x64xf32> to vector<1x64xf32>
    %cst_86 = arith.constant dense<0.000000e+00> : vector<8xf32>
    %154 = vector.multi_reduction <add>, %149, %cst_86 [1] : vector<8x64xf32> to vector<8xf32>
    %155 = vector.shape_cast %154 : vector<8xf32> to vector<8x1xf32>
    %cst_87 = arith.constant 6.400000e+01 : f32
    %156 = vector.broadcast %cst_87 : f32 to vector<8x1xf32>
    %157 = arith.divf %155, %156 : vector<8x1xf32>
    %158 = vector.broadcast %157 : vector<8x1xf32> to vector<8x64xf32>
    %159 = arith.subf %149, %158 : vector<8x64xf32>
    %160 = arith.mulf %159, %159 : vector<8x64xf32>
    %cst_88 = arith.constant dense<0.000000e+00> : vector<8xf32>
    %161 = vector.multi_reduction <add>, %160, %cst_88 [1] : vector<8x64xf32> to vector<8xf32>
    %162 = vector.shape_cast %161 : vector<8xf32> to vector<8x1xf32>
    %cst_89 = arith.constant 6.400000e+01 : f32
    %163 = vector.broadcast %cst_89 : f32 to vector<8x1xf32>
    %164 = arith.divf %162, %163 : vector<8x1xf32>
    %cst_90 = arith.constant 9.99999974E-6 : f32
    %165 = vector.broadcast %cst_90 : f32 to vector<8x1xf32>
    %166 = arith.addf %164, %165 : vector<8x1xf32>
    %167 = math.rsqrt %166 : vector<8x1xf32>
    %168 = vector.broadcast %167 : vector<8x1xf32> to vector<8x64xf32>
    %169 = arith.mulf %159, %168 : vector<8x64xf32>
    %170 = vector.broadcast %151 : vector<1x64xf32> to vector<8x64xf32>
    %171 = arith.mulf %169, %170 : vector<8x64xf32>
    %172 = vector.broadcast %153 : vector<1x64xf32> to vector<8x64xf32>
    %173 = arith.addf %171, %172 : vector<8x64xf32>
    %174 = arith.truncf %173 : vector<8x64xf32> to vector<8x64xbf16>
    %c1_91 = arith.constant 1 : index
    %c0_92 = arith.constant 0 : index
    %c0_93 = arith.constant 0 : index
    %175 = vector.load %arg7[%c1_91, %c0_92, %c0_93] : memref<2x64x128xbf16, #tpu.memory_space<vmem>>, vector<1x64x128xbf16>
    %176 = vector.shape_cast %175 : vector<1x64x128xbf16> to vector<64x128xbf16>
    %cst_94 = arith.constant dense<0.000000e+00> : vector<8x128xf32>
    %177 = tpu.matmul %174, %176, %cst_94 {dimension_numbers = #tpu.dot_dimension_numbers<[1], [0], [0], [1], [0, 0, 1, 1], [], []>} : vector<8x64xbf16>, vector<64x128xbf16>, vector<8x128xf32> -> vector<8x128xf32>
    %c1_95 = arith.constant 1 : index
    %c0_96 = arith.constant 0 : index
    %c0_97 = arith.constant 0 : index
    %178 = vector.load %arg8[%c1_95, %c0_96, %c0_97] : memref<2x1x128xf32, #tpu.memory_space<vmem>>, vector<1x1x128xf32>
    %179 = vector.shape_cast %178 : vector<1x1x128xf32> to vector<1x128xf32>
    %180 = vector.broadcast %179 : vector<1x128xf32> to vector<8x128xf32>
    %181 = arith.addf %177, %180 : vector<8x128xf32>
    %cst_98 = arith.constant 0.000000e+00 : f32
    %182 = vector.broadcast %cst_98 : f32 to vector<8x128xf32>
    %183 = arith.maximumf %181, %182 : vector<8x128xf32>
    %184 = arith.truncf %183 : vector<8x128xf32> to vector<8x128xbf16>
    %c1_99 = arith.constant 1 : index
    %c0_100 = arith.constant 0 : index
    %c0_101 = arith.constant 0 : index
    %185 = vector.load %arg9[%c1_99, %c0_100, %c0_101] : memref<2x128x64xbf16, #tpu.memory_space<vmem>>, vector<1x128x64xbf16>
    %186 = vector.shape_cast %185 : vector<1x128x64xbf16> to vector<128x64xbf16>
    %cst_102 = arith.constant dense<0.000000e+00> : vector<8x64xf32>
    %187 = tpu.matmul %184, %186, %cst_102 {dimension_numbers = #tpu.dot_dimension_numbers<[1], [0], [0], [1], [0, 0, 1, 1], [], []>} : vector<8x128xbf16>, vector<128x64xbf16>, vector<8x64xf32> -> vector<8x64xf32>
    %c1_103 = arith.constant 1 : index
    %c0_104 = arith.constant 0 : index
    %c0_105 = arith.constant 0 : index
    %188 = vector.load %arg10[%c1_103, %c0_104, %c0_105] : memref<2x1x64xf32, #tpu.memory_space<vmem>>, vector<1x1x64xf32>
    %189 = vector.shape_cast %188 : vector<1x1x64xf32> to vector<1x64xf32>
    %190 = vector.broadcast %189 : vector<1x64xf32> to vector<8x64xf32>
    %191 = arith.addf %187, %190 : vector<8x64xf32>
    %192 = arith.addf %173, %191 : vector<8x64xf32>
    %c1_106 = arith.constant 1 : index
    %c0_107 = arith.constant 0 : index
    %c0_108 = arith.constant 0 : index
    %193 = vector.load %arg13[%c1_106, %c0_107, %c0_108] : memref<2x1x64xf32, #tpu.memory_space<vmem>>, vector<1x1x64xf32>
    %194 = vector.shape_cast %193 : vector<1x1x64xf32> to vector<1x64xf32>
    %c1_109 = arith.constant 1 : index
    %c0_110 = arith.constant 0 : index
    %c0_111 = arith.constant 0 : index
    %195 = vector.load %arg14[%c1_109, %c0_110, %c0_111] : memref<2x1x64xf32, #tpu.memory_space<vmem>>, vector<1x1x64xf32>
    %196 = vector.shape_cast %195 : vector<1x1x64xf32> to vector<1x64xf32>
    %cst_112 = arith.constant dense<0.000000e+00> : vector<8xf32>
    %197 = vector.multi_reduction <add>, %192, %cst_112 [1] : vector<8x64xf32> to vector<8xf32>
    %198 = vector.shape_cast %197 : vector<8xf32> to vector<8x1xf32>
    %cst_113 = arith.constant 6.400000e+01 : f32
    %199 = vector.broadcast %cst_113 : f32 to vector<8x1xf32>
    %200 = arith.divf %198, %199 : vector<8x1xf32>
    %201 = vector.broadcast %200 : vector<8x1xf32> to vector<8x64xf32>
    %202 = arith.subf %192, %201 : vector<8x64xf32>
    %203 = arith.mulf %202, %202 : vector<8x64xf32>
    %cst_114 = arith.constant dense<0.000000e+00> : vector<8xf32>
    %204 = vector.multi_reduction <add>, %203, %cst_114 [1] : vector<8x64xf32> to vector<8xf32>
    %205 = vector.shape_cast %204 : vector<8xf32> to vector<8x1xf32>
    %cst_115 = arith.constant 6.400000e+01 : f32
    %206 = vector.broadcast %cst_115 : f32 to vector<8x1xf32>
    %207 = arith.divf %205, %206 : vector<8x1xf32>
    %cst_116 = arith.constant 9.99999974E-6 : f32
    %208 = vector.broadcast %cst_116 : f32 to vector<8x1xf32>
    %209 = arith.addf %207, %208 : vector<8x1xf32>
    %210 = math.rsqrt %209 : vector<8x1xf32>
    %211 = vector.broadcast %210 : vector<8x1xf32> to vector<8x64xf32>
    %212 = arith.mulf %202, %211 : vector<8x64xf32>
    %213 = vector.broadcast %194 : vector<1x64xf32> to vector<8x64xf32>
    %214 = arith.mulf %212, %213 : vector<8x64xf32>
    %215 = vector.broadcast %196 : vector<1x64xf32> to vector<8x64xf32>
    %216 = arith.addf %214, %215 : vector<8x64xf32>
    %c0_117 = arith.constant 0 : index
    %c0_118 = arith.constant 0 : index
    %217 = vector.load %arg15[%c0_117, %c0_118] : memref<1x64xf32, #tpu.memory_space<vmem>>, vector<1x64xf32>
    %218 = vector.broadcast %217 : vector<1x64xf32> to vector<8x64xf32>
    %219 = arith.mulf %216, %218 : vector<8x64xf32>
    %cst_119 = arith.constant dense<0.000000e+00> : vector<8xf32>
    %220 = vector.multi_reduction <add>, %219, %cst_119 [1] : vector<8x64xf32> to vector<8xf32>
    %221 = vector.shape_cast %220 : vector<8xf32> to vector<8x1xf32>
    %c0_120 = arith.constant 0 : index
    %c0_121 = arith.constant 0 : index
    %222 = vector.load %arg16[%c0_120, %c0_121] : memref<1x1xf32, #tpu.memory_space<vmem>>, vector<1x1xf32>
    %223 = vector.broadcast %222 : vector<1x1xf32> to vector<8x1xf32>
    %224 = arith.addf %221, %223 : vector<8x1xf32>
    %c0_122 = arith.constant 0 : index
    %c0_123 = arith.constant 0 : index
    %225 = vector.load %arg17[%c0_122, %c0_123] : memref<8x1xf32, #tpu.memory_space<vmem>>, vector<8x1xf32>
    tpu.vector_store %arg17[%c0_122, %c0_123], %224 {strides = array<i32>} : memref<8x1xf32, #tpu.memory_space<vmem>>, vector<8x1xf32>,
    return
  }
}

</mosaic_0001>

<llo_original>
// kernel: tpu_custom_call.1
$region0: #{tpu_custom_call.1}
  #allocation0 [shape = 'u32[]', space=smem, size = 0x4, offset = 0x4, fixed_abs, tag = 'smem constant byte address 0x4 - core index']
  #allocation1 [shape = 'u32[72,128]{1,0:T(1,128)}', space=vmem, size = 0x9000, scoped, tag = 'internal scratch']
  #allocation2 [shape = 'f32[1,1]{1,0:T(1,128)S(1)}', space=vmem, size = 0x200, scoped, tag = 'scoped memory for tpu_custom_call.1']
  %s0 = inlined_call_operand.vmem [shape: f32[8,16], index: 0, kind: input, shape index: {}]
  %s1 = inlined_call_operand.vmem [shape: bf16[16,64], index: 1, kind: input, shape index: {}]
  %s2 = inlined_call_operand.vmem [shape: f32[1,64], index: 2, kind: input, shape index: {}]
  %s3 = inlined_call_operand.vmem [shape: bf16[8,64,48], index: 3, kind: input, shape index: {}]
  %s4 = inlined_call_operand.vmem [shape: f32[8,1,48], index: 4, kind: input, shape index: {}]
  %s5 = inlined_call_operand.vmem [shape: bf16[8,16,64], index: 5, kind: input, shape index: {}]
  %s6 = inlined_call_operand.vmem [shape: f32[2,1,64], index: 6, kind: input, shape index: {}]
  %s7 = inlined_call_operand.vmem [shape: bf16[2,64,128], index: 7, kind: input, shape index: {}]
  %s8 = inlined_call_operand.vmem [shape: f32[2,1,128], index: 8, kind: input, shape index: {}]
  %s9 = inlined_call_operand.vmem [shape: bf16[2,128,64], index: 9, kind: input, shape index: {}]
  %s10 = inlined_call_operand.vmem [shape: f32[2,1,64], index: 10, kind: input, shape index: {}]
  %s11 = inlined_call_operand.vmem [shape: f32[2,1,64], index: 11, kind: input, shape index: {}]
  %s12 = inlined_call_operand.vmem [shape: f32[2,1,64], index: 12, kind: input, shape index: {}]
  %s13 = inlined_call_operand.vmem [shape: f32[2,1,64], index: 13, kind: input, shape index: {}]
  %s14 = inlined_call_operand.vmem [shape: f32[2,1,64], index: 14, kind: input, shape index: {}]
  %s15 = inlined_call_operand.vmem [shape: f32[1,64], index: 15, kind: input, shape index: {}]
  %s16 = inlined_call_operand.<no memory space> [shape: f32[1,1], index: 16, kind: input, shape index: {}]
  %s17 = inlined_call_operand.vmem [shape: f32[8,1], index: 17, kind: output, shape index: {}]
  %s18 = sld [smem:[#allocation0]]
  $region78: #{tpu_custom_call.1} parent=0
    _
  %s20 = ssub.s32 1, %s18
  %s21 = scalar_select 0, %s20, %s18
  %v22 = vstv %s16
  %23 = vst [vmem:[#allocation2] sm:$0x1] %v22
  // Predicated region
  $region2: #{tpu_custom_call.1} parent=0 // pred_check
    _
  $region3: #{tpu_custom_call.1} parent=0 // pred_check_branch
    %25 = sbr.rel (0) target = $region5
  $region4: #{tpu_custom_call.1} parent=0 // pred_region
    _
  $region5: #{tpu_custom_call.1} parent=0 // pred_fallthru
    _
  // Predicated region
  $region6: #{tpu_custom_call.1} parent=0 // pred_check
    _
  $region7: #{tpu_custom_call.1} parent=0 // pred_check_branch
    %27 = sbr.rel (0) target = $region9
  $region8: #{tpu_custom_call.1} parent=0 // pred_region
    _
  $region9: #{tpu_custom_call.1} parent=0 // pred_fallthru
    _
  // Predicated region
  $region10: #{tpu_custom_call.1} parent=0 // pred_check
    _
  $region11: #{tpu_custom_call.1} parent=0 // pred_check_branch
    %29 = sbr.rel (0) target = $region13
  $region12: #{tpu_custom_call.1} parent=0 // pred_region
    _
  $region13: #{tpu_custom_call.1} parent=0 // pred_fallthru
    _
  // Predicated region
  $region14: #{tpu_custom_call.1} parent=0 // pred_check
    _
  $region15: #{tpu_custom_call.1} parent=0 // pred_check_branch
    %31 = sbr.rel (0) target = $region17
  $region16: #{tpu_custom_call.1} parent=0 // pred_region
    _
  $region17: #{tpu_custom_call.1} parent=0 // pred_fallthru
    _
  // Predicated region
  $region18: #{tpu_custom_call.1} parent=0 // pred_check
    _
  $region19: #{tpu_custom_call.1} parent=0 // pred_check_branch
    %33 = sbr.rel (0) target = $region21
  $region20: #{tpu_custom_call.1} parent=0 // pred_region
    _
  $region21: #{tpu_custom_call.1} parent=0 // pred_fallthru
    _
  // Predicated region
  $region22: #{tpu_custom_call.1} parent=0 // pred_check
    _
  $region23: #{tpu_custom_call.1} parent=0 // pred_check_branch
    %35 = sbr.rel (0) target = $region25
  $region24: #{tpu_custom_call.1} parent=0 // pred_region
    _
  $region25: #{tpu_custom_call.1} parent=0 // pred_fallthru
    _
  // Predicated region
  $region26: #{tpu_custom_call.1} parent=0 // pred_check
    _
  $region27: #{tpu_custom_call.1} parent=0 // pred_check_branch
    %37 = sbr.rel (0) target = $region29
  $region28: #{tpu_custom_call.1} parent=0 // pred_region
    _
  $region29: #{tpu_custom_call.1} parent=0 // pred_fallthru
    _
  // Predicated region
  $region30: #{tpu_custom_call.1} parent=0 // pred_check
    _
  $region31: #{tpu_custom_call.1} parent=0 // pred_check_branch
    %39 = sbr.rel (0) target = $region33
  $region32: #{tpu_custom_call.1} parent=0 // pred_region
    _
  $region33: #{tpu_custom_call.1} parent=0 // pred_fallthru
    _
  // Predicated region
  $region34: #{tpu_custom_call.1} parent=0 // pred_check
    _
  $region35: #{tpu_custom_call.1} parent=0 // pred_check_branch
    %41 = sbr.rel (0) target = $region37
  $region36: #{tpu_custom_call.1} parent=0 // pred_region
    _
  $region37: #{tpu_custom_call.1} parent=0 // pred_fallthru
    _
  // Predicated region
  $region38: #{tpu_custom_call.1} parent=0 // pred_check
    _
  $region39: #{tpu_custom_call.1} parent=0 // pred_check_branch
    %43 = sbr.rel (0) target = $region41
  $region40: #{tpu_custom_call.1} parent=0 // pred_region
    _
  $region41: #{tpu_custom_call.1} parent=0 // pred_fallthru
    _
  // Predicated region
  $region42: #{tpu_custom_call.1} parent=0 // pred_check
    _
  $region43: #{tpu_custom_call.1} parent=0 // pred_check_branch
    %45 = sbr.rel (0) target = $region45
  $region44: #{tpu_custom_call.1} parent=0 // pred_region
    _
  $region45: #{tpu_custom_call.1} parent=0 // pred_fallthru
    _
  // Predicated region
  $region46: #{tpu_custom_call.1} parent=0 // pred_check
    _
  $region47: #{tpu_custom_call.1} parent=0 // pred_check_branch
    %47 = sbr.rel (0) target = $region49
  $region48: #{tpu_custom_call.1} parent=0 // pred_region
    _
  $region49: #{tpu_custom_call.1} parent=0 // pred_fallthru
    _
  // Predicated region
  $region50: #{tpu_custom_call.1} parent=0 // pred_check
    _
  $region51: #{tpu_custom_call.1} parent=0 // pred_check_branch
    %49 = sbr.rel (0) target = $region53
  $region52: #{tpu_custom_call.1} parent=0 // pred_region
    _
  $region53: #{tpu_custom_call.1} parent=0 // pred_fallthru
    _
  // Predicated region
  $region54: #{tpu_custom_call.1} parent=0 // pred_check
    _
  $region55: #{tpu_custom_call.1} parent=0 // pred_check_branch
    %51 = sbr.rel (0) target = $region57
  $region56: #{tpu_custom_call.1} parent=0 // pred_region
    _
  $region57: #{tpu_custom_call.1} parent=0 // pred_fallthru
    _
  // Predicated region
  $region58: #{tpu_custom_call.1} parent=0 // pred_check
    _
  $region59: #{tpu_custom_call.1} parent=0 // pred_check_branch
    %53 = sbr.rel (0) target = $region61
  $region60: #{tpu_custom_call.1} parent=0 // pred_region
    _
  $region61: #{tpu_custom_call.1} parent=0 // pred_fallthru
    _
  // Predicated region
  $region62: #{tpu_custom_call.1} parent=0 // pred_check
    _
  $region63: #{tpu_custom_call.1} parent=0 // pred_check_branch
    %55 = sbr.rel (0) target = $region65
  $region64: #{tpu_custom_call.1} parent=0 // pred_region
    _
  $region65: #{tpu_custom_call.1} parent=0 // pred_fallthru
    _
  // Predicated region
  $region66: #{tpu_custom_call.1} parent=0 // pred_check
    _
  $region67: #{tpu_custom_call.1} parent=0 // pred_check_branch
    %57 = sbr.rel (0) target = $region69
  $region68: #{tpu_custom_call.1} parent=0 // pred_region
    _
  $region69: #{tpu_custom_call.1} parent=0 // pred_fallthru
    _
  %v59 = vld [vmem:[%s0] sm:$0xff]
  %v60 = vpack.c.bf16 %v59, %v59
  %v61 = vld [vmem:[%s1] sm:$0xf]
  %v62 = vld [vmem:[%s1 + $0x4] sm:$0xf]
  %v63 = vld [vmem:[%s2] sm:$0x1]
  %v65 = vperm.slane %v63, 0
  %v69 = vunpack.c.l.b16 %v61
  %v70 = vunpack.c.l.b16 %v62
  %v71 = vpack.c.b16 %v70, %v69
  %vm73 = vcmask 130048
  %v75 = vsel %vm73, %v60, 0
  %77 = vmatpush.bf16.msra.mxu0 0
  %78 = vmatpush.bf16.msra.mxu0 0
  %79 = vmatpush.bf16.msra.mxu0 0
  %80 = vmatpush.bf16.msra.mxu0 0
  %81 = vmatpush.bf16.msra.mxu0 0
  %82 = vmatpush.bf16.msra.mxu0 0
  %83 = vmatpush.bf16.msra.mxu0 0
  %84 = vmatpush.bf16.msra.mxu0 %v71
  %85 = vmatmul.bf16.gmra.mxu0 %v75
  %v86 = vpop.f32.mrf.mxu0
  %v87 = vadd.f32 %v65, %v86
  %v88 = vpop.f32.mrf.mxu0
  %89 = vdwg.mxu0
  %v90 = vld [vmem:[%s3] sm:$0xf]
  %v91 = vld [vmem:[%s3 + $0x4] sm:$0xf]
  %v92 = vld [vmem:[%s3 + $0x8] sm:$0xf]
  %v93 = vld [vmem:[%s3 + $0xc] sm:$0xf]
  %v94 = vld [vmem:[%s3 + $0x10] sm:$0xf]
  %v95 = vld [vmem:[%s3 + $0x14] sm:$0xf]
  %v96 = vld [vmem:[%s3 + $0x18] sm:$0xf]
  %v97 = vld [vmem:[%s3 + $0x1c] sm:$0xf]
  %v98 = vld [vmem:[%s3 + $0x20] sm:$0xf]
  %v99 = vld [vmem:[%s3 + $0x24] sm:$0xf]
  %v100 = vld [vmem:[%s3 + $0x28] sm:$0xf]
  %v101 = vld [vmem:[%s3 + $0x2c] sm:$0xf]
  %v102 = vld [vmem:[%s3 + $0x30] sm:$0xf]
  %v103 = vld [vmem:[%s3 + $0x34] sm:$0xf]
  %v104 = vld [vmem:[%s3 + $0x38] sm:$0xf]
  %v105 = vld [vmem:[%s3 + $0x3c] sm:$0xf]
  %v106 = vld [vmem:[%s3 + $0x40] sm:$0xf]
  %v107 = vld [vmem:[%s3 + $0x44] sm:$0xf]
  %v108 = vld [vmem:[%s3 + $0x48] sm:$0xf]
  %v109 = vld [vmem:[%s3 + $0x4c] sm:$0xf]
  %v110 = vld [vmem:[%s3 + $0x50] sm:$0xf]
  %v111 = vld [vmem:[%s3 + $0x54] sm:$0xf]
  %v112 = vld [vmem:[%s3 + $0x58] sm:$0xf]
  %v113 = vld [vmem:[%s3 + $0x5c] sm:$0xf]
  %v114 = vld [vmem:[%s3 + $0x60] sm:$0xf]
  %v115 = vld [vmem:[%s3 + $0x64] sm:$0xf]
  %v116 = vld [vmem:[%s3 + $0x68] sm:$0xf]
  %v117 = vld [vmem:[%s3 + $0x6c] sm:$0xf]
  %v118 = vld [vmem:[%s3 + $0x70] sm:$0xf]
  %v119 = vld [vmem:[%s3 + $0x74] sm:$0xf]
  %v120 = vld [vmem:[%s3 + $0x78] sm:$0xf]
  %v121 = vld [vmem:[%s3 + $0x7c] sm:$0xf]
  %v122 = vld [vmem:[%s4] sm:$0x1]
  %v123 = vld [vmem:[%s4 + $0x1] sm:$0x1]
  %v124 = vld [vmem:[%s4 + $0x2] sm:$0x1]
  %v125 = vld [vmem:[%s4 + $0x3] sm:$0x1]
  %v126 = vld [vmem:[%s5] sm:$0xf]
  %v127 = vld [vmem:[%s5 + $0x4] sm:$0xf]
  %v128 = vld [vmem:[%s5 + $0x8] sm:$0xf]
  %v129 = vld [vmem:[%s5 + $0xc] sm:$0xf]
  %v130 = vld [vmem:[%s5 + $0x10] sm:$0xf]
  %v131 = vld [vmem:[%s5 + $0x14] sm:$0xf]
  %v132 = vld [vmem:[%s5 + $0x18] sm:$0xf]
  %v133 = vld [vmem:[%s5 + $0x1c] sm:$0xf]
  %v134 = vld [vmem:[%s6] sm:$0x1]
  %v135 = vpack.c.bf16 %v87, %v87
  %v140 = vperm.slane %v122, 0
  %v141 = vperm.slane %v123, 0
  %v142 = vperm.slane %v124, 0
  %v143 = vperm.slane %v125, 0
  %v156 = vunpack.c.l.b16 %v90
  %v157 = vunpack.c.l.b16 %v91
  %v158 = vunpack.c.l.b16 %v92
  %v159 = vunpack.c.l.b16 %v93
  %v160 = vunpack.c.l.b16 %v94
  %v161 = vunpack.c.l.b16 %v95
  %v162 = vunpack.c.l.b16 %v96
  %v163 = vunpack.c.l.b16 %v97
  %v164 = vpack.c.b16 %v157, %v156
  %v165 = vpack.c.b16 %v159, %v158
  %v166 = vpack.c.b16 %v161, %v160
  %v167 = vpack.c.b16 %v163, %v162
  %vm172 = vcmask 523264
  %v174 = vsel %vm172, %v135, 0
  %176 = vmatpush.bf16.msra.mxu0 0
  %177 = vmatpush.bf16.msra.mxu0 0
  %178 = vmatpush.bf16.msra.mxu0 0
  %179 = vmatpush.bf16.msra.mxu0 0
  %180 = vmatpush.bf16.msra.mxu0 %v167
  %181 = vmatpush.bf16.msra.mxu0 %v166
  %182 = vmatpush.bf16.msra.mxu0 %v165
  %183 = vmatpush.bf16.msra.mxu0 %v164
  %184 = vmatmul.bf16.gmra.mxu0 %v174
  %v185 = vpop.f32.mrf.mxu0
  %v186 = vadd.f32 %v140, %v185
  %v187 = vpop.f32.mrf.mxu0
  %188 = vdwg.mxu0
  %v197 = vunpack.c.l.b16 %v98
  %v198 = vunpack.c.l.b16 %v99
  %v199 = vunpack.c.l.b16 %v100
  %v200 = vunpack.c.l.b16 %v101
  %v201 = vunpack.c.l.b16 %v102
  %v202 = vunpack.c.l.b16 %v103
  %v203 = vunpack.c.l.b16 %v104
  %v204 = vunpack.c.l.b16 %v105
  %v205 = vpack.c.b16 %v198, %v197
  %v206 = vpack.c.b16 %v200, %v199
  %v207 = vpack.c.b16 %v202, %v201
  %v208 = vpack.c.b16 %v204, %v203
  %213 = vmatpush.bf16.msra.mxu0 0
  %214 = vmatpush.bf16.msra.mxu0 0
  %215 = vmatpush.bf16.msra.mxu0 0
  %216 = vmatpush.bf16.msra.mxu0 0
  %217 = vmatpush.bf16.msra.mxu0 %v208
  %218 = vmatpush.bf16.msra.mxu0 %v207
  %219 = vmatpush.bf16.msra.mxu0 %v206
  %220 = vmatpush.bf16.msra.mxu0 %v205
  %221 = vmatmul.bf16.gmra.mxu0 %v174
  %v222 = vpop.f32.mrf.mxu0
  %v223 = vadd.f32 %v141, %v222
  %v224 = vpop.f32.mrf.mxu0
  %225 = vdwg.mxu0
  %v234 = vunpack.c.l.b16 %v106
  %v235 = vunpack.c.l.b16 %v107
  %v236 = vunpack.c.l.b16 %v108
  %v237 = vunpack.c.l.b16 %v109
  %v238 = vunpack.c.l.b16 %v110
  %v239 = vunpack.c.l.b16 %v111
  %v240 = vunpack.c.l.b16 %v112
  %v241 = vunpack.c.l.b16 %v113
  %v242 = vpack.c.b16 %v235, %v234
  %v243 = vpack.c.b16 %v237, %v236
  %v244 = vpack.c.b16 %v239, %v238
  %v245 = vpack.c.b16 %v241, %v240
  %250 = vmatpush.bf16.msra.mxu0 0
  %251 = vmatpush.bf16.msra.mxu0 0
  %252 = vmatpush.bf16.msra.mxu0 0
  %253 = vmatpush.bf16.msra.mxu0 0
  %254 = vmatpush.bf16.msra.mxu0 %v245
  %255 = vmatpush.bf16.msra.mxu0 %v244
  %256 = vmatpush.bf16.msra.mxu0 %v243
  %257 = vmatpush.bf16.msra.mxu0 %v242
  %258 = vmatmul.bf16.gmra.mxu0 %v174
  %v259 = vpop.f32.mrf.mxu0
  %v260 = vadd.f32 %v142, %v259
  %v261 = vpop.f32.mrf.mxu0
  %262 = vdwg.mxu0
  %v271 = vunpack.c.l.b16 %v114
  %v272 = vunpack.c.l.b16 %v115
  %v273 = vunpack.c.l.b16 %v116
  %v274 = vunpack.c.l.b16 %v117
  %v275 = vunpack.c.l.b16 %v118
  %v276 = vunpack.c.l.b16 %v119
  %v277 = vunpack.c.l.b16 %v120
  %v278 = vunpack.c.l.b16 %v121
  %v279 = vpack.c.b16 %v272, %v271
  %v280 = vpack.c.b16 %v274, %v273
  %v281 = vpack.c.b16 %v276, %v275
  %v282 = vpack.c.b16 %v278, %v277
  %287 = vmatpush.bf16.msra.mxu0 0
  %288 = vmatpush.bf16.msra.mxu0 0
  %289 = vmatpush.bf16.msra.mxu0 0
  %290 = vmatpush.bf16.msra.mxu0 0
  %291 = vmatpush.bf16.msra.mxu0 %v282
  %292 = vmatpush.bf16.msra.mxu0 %v281
  %293 = vmatpush.bf16.msra.mxu0 %v280
  %294 = vmatpush.bf16.msra.mxu0 %v279
  %295 = vmatmul.bf16.gmra.mxu0 %v174
  %v296 = vpop.f32.mrf.mxu0
  %v297 = vadd.f32 %v143, %v296
  %v298 = vpop.f32.mrf.mxu0
  %299 = vdwg.mxu0
  %v300 = vmul.f32 %v186, 0.25
  %v301 = vmul.f32 %v223, 0.25
  %v302 = vmul.f32 %v260, 0.25
  %v303 = vmul.f32 %v297, 0.25
  %v304 = vpack.c.bf16 %v300, %v300
  %v305 = vpack.c.bf16 %v301, %v301
  %v306 = vpack.c.bf16 %v302, %v302
  %v307 = vpack.c.bf16 %v303, %v303
  %v308 = vpack.c.bf16 %v186, %v186
  %v309 = vpack.c.bf16 %v223, %v223
  %v310 = vpack.c.bf16 %v260, %v260
  %v311 = vpack.c.bf16 %v297, %v297
  %v313 = vunpack.c.l.b16 %v308
  %v314 = vpack.c.b16 %v313, %v313
  %315 = vrot.lane.b32.xlu0 %v314, 112
  %v316 = vpop.permute.xlu0 %315
  %v318 = vsel %vm73, %v304, 0
  %v321 = vsel %vm73, %v316, 0
  %323 = vmatpush.bf16.xpose.msra.mxu0 0
  %324 = vmatpush.bf16.xpose.msra.mxu0 0
  %325 = vmatpush.bf16.xpose.msra.mxu0 0
  %326 = vmatpush.bf16.xpose.msra.mxu0 0
  %327 = vmatpush.bf16.xpose.msra.mxu0 0
  %328 = vmatpush.bf16.xpose.msra.mxu0 0
  %329 = vmatpush.bf16.xpose.msra.mxu0 0
  %330 = vmatpush.bf16.xpose.msra.mxu0 %v321
  %331 = vmatmul.bf16.gmra.mxu0 %v318
  %v332 = vpop.f32.mrf.mxu0
  %v333 = vadd.f32 0.0, %v332
  %v334 = vpop.f32.mrf.mxu0
  %335 = vdwg.mxu0
  %v337 = vunpack.c.l.b16 %v309
  %v338 = vpack.c.b16 %v337, %v337
  %339 = vrot.lane.b32.xlu0 %v338, 112
  %v340 = vpop.permute.xlu0 %339
  %v342 = vsel %vm73, %v305, 0
  %v345 = vsel %vm73, %v340, 0
  %347 = vmatpush.bf16.xpose.msra.mxu0 0
  %348 = vmatpush.bf16.xpose.msra.mxu0 0
  %349 = vmatpush.bf16.xpose.msra.mxu0 0
  %350 = vmatpush.bf16.xpose.msra.mxu0 0
  %351 = vmatpush.bf16.xpose.msra.mxu0 0
  %352 = vmatpush.bf16.xpose.msra.mxu0 0
  %353 = vmatpush.bf16.xpose.msra.mxu0 0
  %354 = vmatpush.bf16.xpose.msra.mxu0 %v345
  %355 = vmatmul.bf16.gmra.mxu0 %v342
  %v356 = vpop.f32.mrf.mxu0
  %v357 = vadd.f32 0.0, %v356
  %v358 = vpop.f32.mrf.mxu0
  %359 = vdwg.mxu0
  %v361 = vunpack.c.l.b16 %v310
  %v362 = vpack.c.b16 %v361, %v361
  %363 = vrot.lane.b32.xlu0 %v362, 112
  %v364 = vpop.permute.xlu0 %363
  %v366 = vsel %vm73, %v306, 0
  %v369 = vsel %vm73, %v364, 0
  %371 = vmatpush.bf16.xpose.msra.mxu0 0
  %372 = vmatpush.bf16.xpose.msra.mxu0 0
  %373 = vmatpush.bf16.xpose.msra.mxu0 0
  %374 = vmatpush.bf16.xpose.msra.mxu0 0
  %375 = vmatpush.bf16.xpose.msra.mxu0 0
  %376 = vmatpush.bf16.xpose.msra.mxu0 0
  %377 = vmatpush.bf16.xpose.msra.mxu0 0
  %378 = vmatpush.bf16.xpose.msra.mxu0 %v369
  %379 = vmatmul.bf16.gmra.mxu0 %v366
  %v380 = vpop.f32.mrf.mxu0
  %v381 = vadd.f32 0.0, %v380
  %v382 = vpop.f32.mrf.mxu0
  %383 = vdwg.mxu0
  %v385 = vunpack.c.l.b16 %v311
  %v386 = vpack.c.b16 %v385, %v385
  %387 = vrot.lane.b32.xlu0 %v386, 112
  %v388 = vpop.permute.xlu0 %387
  %v390 = vsel %vm73, %v307, 0
  %v393 = vsel %vm73, %v388, 0
  %395 = vmatpush.bf16.xpose.msra.mxu0 0
  %396 = vmatpush.bf16.xpose.msra.mxu0 0
  %397 = vmatpush.bf16.xpose.msra.mxu0 0
  %398 = vmatpush.bf16.xpose.msra.mxu0 0
  %399 = vmatpush.bf16.xpose.msra.mxu0 0
  %400 = vmatpush.bf16.xpose.msra.mxu0 0
  %401 = vmatpush.bf16.xpose.msra.mxu0 0
  %402 = vmatpush.bf16.xpose.msra.mxu0 %v393
  %403 = vmatmul.bf16.gmra.mxu0 %v390
  %v404 = vpop.f32.mrf.mxu0
  %v405 = vadd.f32 0.0, %v404
  %v406 = vpop.f32.mrf.mxu0
  %407 = vdwg.mxu0
  %vm408 = vcmask 64512
  %v409 = vsel %vm408, %v333, -inf
  %410 = vmax.xlane.f32.xlu0 %v409
  %v411 = vpop.xlane.xlu0 %410
  %v412 = vsel %vm408, %v357, -inf
  %413 = vmax.xlane.f32.xlu0 %v412
  %v414 = vpop.xlane.xlu0 %413
  %v415 = vsel %vm408, %v381, -inf
  %416 = vmax.xlane.f32.xlu0 %v415
  %v417 = vpop.xlane.xlu0 %416
  %v418 = vsel %vm408, %v405, -inf
  %419 = vmax.xlane.f32.xlu0 %v418
  %v420 = vpop.xlane.xlu0 %419
  %v421 = vsub.f32 %v333, %v411
  %v422 = vsub.f32 %v357, %v414
  %v423 = vsub.f32 %v381, %v417
  %v424 = vsub.f32 %v405, %v420
  %v425 = vmul.f32 %v421, 1.442695
  %v426 = vpow.pop %v425
  %v427 = vmul.f32 %v422, 1.442695
  %v428 = vpow.pop %v427
  %v429 = vmul.f32 %v423, 1.442695
  %v430 = vpow.pop %v429
  %v431 = vmul.f32 %v424, 1.442695
  %v432 = vpow.pop %v431
  %v433 = vsel %vm408, %v426, 0.0
  %434 = vadd.xlane.f32.xlu0 %v433
  %v435 = vpop.xlane.xlu0 %434
  %v436 = vsel %vm408, %v428, 0.0
  %437 = vadd.xlane.f32.xlu0 %v436
  %v438 = vpop.xlane.xlu0 %437
  %v439 = vsel %vm408, %v430, 0.0
  %440 = vadd.xlane.f32.xlu0 %v439
  %v441 = vpop.xlane.xlu0 %440
  %v442 = vsel %vm408, %v432, 0.0
  %443 = vadd.xlane.f32.xlu0 %v442
  %v444 = vpop.xlane.xlu0 %443
  %v445 = vrcp.pop %v435
  %v446 = vrcp.pop %v438
  %v447 = vrcp.pop %v441
  %v448 = vrcp.pop %v444
  %v449 = vmul.f32 %v426, %v445
  %v450 = vmul.f32 %v428, %v446
  %v451 = vmul.f32 %v430, %v447
  %v452 = vmul.f32 %v432, %v448
  %v453 = vpack.c.bf16 %v449, %v449
  %v454 = vpack.c.bf16 %v450, %v450
  %v455 = vpack.c.bf16 %v451, %v451
  %v456 = vpack.c.bf16 %v452, %v452
  %457 = vrot.lane.b32.xlu0 %v314, 96
  %v458 = vpop.permute.xlu0 %457
  %v460 = vsel %vm408, %v453, 0
  %vm462 = vcmask 1043456
  %v464 = vsel %vm462, %v458, 0
  %466 = vmatpush.bf16.msra.mxu0 0
  %467 = vmatpush.bf16.msra.mxu0 0
  %468 = vmatpush.bf16.msra.mxu0 0
  %469 = vmatpush.bf16.msra.mxu0 0
  %470 = vmatpush.bf16.msra.mxu0 0
  %471 = vmatpush.bf16.msra.mxu0 0
  %472 = vmatpush.bf16.msra.mxu0 0
  %473 = vmatpush.bf16.msra.mxu0 %v464
  %474 = vmatmul.bf16.gmra.mxu0 %v460
  %v475 = vpop.f32.mrf.mxu0
  %v476 = vadd.f32 0.0, %v475
  %v477 = vpop.f32.mrf.mxu0
  %478 = vdwg.mxu0
  %479 = vrot.lane.b32.xlu0 %v338, 96
  %v480 = vpop.permute.xlu0 %479
  %v482 = vsel %vm408, %v454, 0
  %v485 = vsel %vm462, %v480, 0
  %487 = vmatpush.bf16.msra.mxu0 0
  %488 = vmatpush.bf16.msra.mxu0 0
  %489 = vmatpush.bf16.msra.mxu0 0
  %490 = vmatpush.bf16.msra.mxu0 0
  %491 = vmatpush.bf16.msra.mxu0 0
  %492 = vmatpush.bf16.msra.mxu0 0
  %493 = vmatpush.bf16.msra.mxu0 0
  %494 = vmatpush.bf16.msra.mxu0 %v485
  %495 = vmatmul.bf16.gmra.mxu0 %v482
  %v496 = vpop.f32.mrf.mxu0
  %v497 = vadd.f32 0.0, %v496
  %v498 = vpop.f32.mrf.mxu0
  %499 = vdwg.mxu0
  %500 = vrot.lane.b32.xlu0 %v362, 96
  %v501 = vpop.permute.xlu0 %500
  %v503 = vsel %vm408, %v455, 0
  %v506 = vsel %vm462, %v501, 0
  %508 = vmatpush.bf16.msra.mxu0 0
  %509 = vmatpush.bf16.msra.mxu0 0
  %510 = vmatpush.bf16.msra.mxu0 0
  %511 = vmatpush.bf16.msra.mxu0 0
  %512 = vmatpush.bf16.msra.mxu0 0
  %513 = vmatpush.bf16.msra.mxu0 0
  %514 = vmatpush.bf16.msra.mxu0 0
  %515 = vmatpush.bf16.msra.mxu0 %v506
  %516 = vmatmul.bf16.gmra.mxu0 %v503
  %v517 = vpop.f32.mrf.mxu0
  %v518 = vadd.f32 0.0, %v517
  %v519 = vpop.f32.mrf.mxu0
  %520 = vdwg.mxu0
  %521 = vrot.lane.b32.xlu0 %v386, 96
  %v522 = vpop.permute.xlu0 %521
  %v524 = vsel %vm408, %v456, 0
  %v527 = vsel %vm462, %v522, 0
  %529 = vmatpush.bf16.msra.mxu0 0
  %530 = vmatpush.bf16.msra.mxu0 0
  %531 = vmatpush.bf16.msra.mxu0 0
  %532 = vmatpush.bf16.msra.mxu0 0
  %533 = vmatpush.bf16.msra.mxu0 0
  %534 = vmatpush.bf16.msra.mxu0 0
  %535 = vmatpush.bf16.msra.mxu0 0
  %536 = vmatpush.bf16.msra.mxu0 %v527
  %537 = vmatmul.bf16.gmra.mxu0 %v524
  %v538 = vpop.f32.mrf.mxu0
  %v539 = vadd.f32 0.0, %v538
  %v540 = vpop.f32.mrf.mxu0
  %541 = vdwg.mxu0
  %v542 = vpack.c.bf16 %v476, %v476
  %v543 = vpack.c.bf16 %v497, %v497
  %v544 = vpack.c.bf16 %v518, %v518
  %v545 = vpack.c.bf16 %v539, %v539
  %v548 = vunpack.c.l.b16 %v126
  %v549 = vunpack.c.l.b16 %v127
  %v550 = vpack.c.b16 %v549, %v548
  %v553 = vsel %vm73, %v542, 0
  %555 = vmatpush.bf16.msra.mxu0 0
  %556 = vmatpush.bf16.msra.mxu0 0
  %557 = vmatpush.bf16.msra.mxu0 0
  %558 = vmatpush.bf16.msra.mxu0 0
  %559 = vmatpush.bf16.msra.mxu0 0
  %560 = vmatpush.bf16.msra.mxu0 0
  %561 = vmatpush.bf16.msra.mxu0 0
  %562 = vmatpush.bf16.msra.mxu0 %v550
  %563 = vmatmul.bf16.gmra.mxu0 %v553
  %v564 = vpop.f32.mrf.mxu0
  %v565 = vadd.f32 0.0, %v564
  %v566 = vpop.f32.mrf.mxu0
  %567 = vdwg.mxu0
  %v570 = vunpack.c.l.b16 %v128
  %v571 = vunpack.c.l.b16 %v129
  %v572 = vpack.c.b16 %v571, %v570
  %v575 = vsel %vm73, %v543, 0
  %577 = vmatpush.bf16.msra.mxu0 0
  %578 = vmatpush.bf16.msra.mxu0 0
  %579 = vmatpush.bf16.msra.mxu0 0
  %580 = vmatpush.bf16.msra.mxu0 0
  %581 = vmatpush.bf16.msra.mxu0 0
  %582 = vmatpush.bf16.msra.mxu0 0
  %583 = vmatpush.bf16.msra.mxu0 0
  %584 = vmatpush.bf16.msra.mxu0 %v572
  %585 = vmatmul.bf16.gmra.mxu0 %v575
  %v586 = vpop.f32.mrf.mxu0
  %v587 = vadd.f32 0.0, %v586
  %v588 = vpop.f32.mrf.mxu0
  %589 = vdwg.mxu0
  %v592 = vunpack.c.l.b16 %v130
  %v593 = vunpack.c.l.b16 %v131
  %v594 = vpack.c.b16 %v593, %v592
  %v597 = vsel %vm73, %v544, 0
  %599 = vmatpush.bf16.msra.mxu0 0
  %600 = vmatpush.bf16.msra.mxu0 0
  %601 = vmatpush.bf16.msra.mxu0 0
  %602 = vmatpush.bf16.msra.mxu0 0
  %603 = vmatpush.bf16.msra.mxu0 0
  %604 = vmatpush.bf16.msra.mxu0 0
  %605 = vmatpush.bf16.msra.mxu0 0
  %606 = vmatpush.bf16.msra.mxu0 %v594
  %607 = vmatmul.bf16.gmra.mxu0 %v597
  %v608 = vpop.f32.mrf.mxu0
  %v609 = vadd.f32 0.0, %v608
  %v610 = vpop.f32.mrf.mxu0
  %611 = vdwg.mxu0
  %v614 = vunpack.c.l.b16 %v132
  %v615 = vunpack.c.l.b16 %v133
  %v616 = vpack.c.b16 %v615, %v614
  %v619 = vsel %vm73, %v545, 0
  %621 = vmatpush.bf16.msra.mxu0 0
  %622 = vmatpush.bf16.msra.mxu0 0
  %623 = vmatpush.bf16.msra.mxu0 0
  %624 = vmatpush.bf16.msra.mxu0 0
  %625 = vmatpush.bf16.msra.mxu0 0
  %626 = vmatpush.bf16.msra.mxu0 0
  %627 = vmatpush.bf16.msra.mxu0 0
  %628 = vmatpush.bf16.msra.mxu0 %v616
  %629 = vmatmul.bf16.gmra.mxu0 %v619
  %v630 = vpop.f32.mrf.mxu0
  %v631 = vadd.f32 0.0, %v630
  %v632 = vpop.f32.mrf.mxu0
  %633 = vdwg.mxu0
  %v634 = vsel %vm172, %v565, 0.0
  %v635 = vsel %vm172, %v587, 0.0
  %v636 = vadd.f32 %v634, %v635
  %v637 = vsel %vm172, %v609, 0.0
  %v638 = vadd.f32 %v636, %v637
  %v639 = vsel %vm172, %v631, 0.0
  %v640 = vadd.f32 %v638, %v639
  %v642 = vperm.slane %v134, 0
  %v644 = vadd.f32 %v640, %v642
  %v645 = vadd.f32 %v87, %v644
  %v646 = vld [vmem:[%s11] sm:$0x1]
  %v647 = vld [vmem:[%s12] sm:$0x1]
  %v648 = vsel %vm172, %v645, 0.0
  %649 = vadd.xlane.f32.xlu0 %v648
  %v650 = vpop.xlane.xlu0 %649
  %v651 = vrcp.pop 64.0
  %v652 = vmul.f32 64.0, %v651
  %v653 = vsub.f32 1.0, %v652
  %v654 = vmul.f32 %v651, %v653
  %v655 = vadd.f32 %v651, %v654
  %vm656 = vweird.f32 %v651
  %v657 = vsel %vm656, %v651, %v655
  %v658 = vmul.f32 %v650, %v657
  %v659 = vsub.f32 %v645, %v658
  %v660 = vmul.f32 %v659, %v659
  %v661 = vsel %vm172, %v660, 0.0
  %662 = vadd.xlane.f32.xlu0 %v661
  %v663 = vpop.xlane.xlu0 %662
  %v664 = vmul.f32 %v663, %v657
  %v665 = vadd.f32 %v664, 1e-05
  %v666 = vrsqrt.pop %v665
  %v667 = vmul.f32 %v666, %v665
  %v668 = vmul.f32 %v667, %v666
  %v669 = vmul.f32 0.5, %v668
  %v670 = vsub.f32 1.5, %v669
  %v671 = vmul.f32 %v666, %v670
  %vm672 = vweird.f32 %v665
  %vm673 = vweird.f32 %v666
  %vm674 = vmor %vm672, %vm673
  %v675 = vsel %vm674, %v666, %v671
  %v676 = vmul.f32 %v659, %v675
  %v678 = vperm.slane %v646, 0
  %v680 = vmul.f32 %v676, %v678
  %v682 = vperm.slane %v647, 0
  %v684 = vadd.f32 %v680, %v682
  %v685 = vpack.c.bf16 %v684, %v684
  %v686 = vld [vmem:[%s7] sm:$0xf]
  %v687 = vld [vmem:[%s7 + $0x4] sm:$0xf]
  %v688 = vld [vmem:[%s7 + $0x8] sm:$0xf]
  %v689 = vld [vmem:[%s7 + $0xc] sm:$0xf]
  %v690 = vld [vmem:[%s7 + $0x10] sm:$0xf]
  %v691 = vld [vmem:[%s7 + $0x14] sm:$0xf]
  %v692 = vld [vmem:[%s7 + $0x18] sm:$0xf]
  %v693 = vld [vmem:[%s7 + $0x1c] sm:$0xf]
  %v694 = vld [vmem:[%s8] sm:$0x1]
  %v696 = vperm.slane %v694, 0
  %v706 = vunpack.c.l.b16 %v686
  %v707 = vunpack.c.l.b16 %v687
  %v708 = vunpack.c.l.b16 %v688
  %v709 = vunpack.c.l.b16 %v689
  %v710 = vunpack.c.l.b16 %v690
  %v711 = vunpack.c.l.b16 %v691
  %v712 = vunpack.c.l.b16 %v692
  %v713 = vunpack.c.l.b16 %v693
  %v714 = vpack.c.b16 %v707, %v706
  %v715 = vpack.c.b16 %v709, %v708
  %v716 = vpack.c.b16 %v711, %v710
  %v717 = vpack.c.b16 %v713, %v712
  %v723 = vsel %vm172, %v685, 0
  %725 = vmatpush.bf16.msra.mxu0 0
  %726 = vmatpush.bf16.msra.mxu0 0
  %727 = vmatpush.bf16.msra.mxu0 0
  %728 = vmatpush.bf16.msra.mxu0 0
  %729 = vmatpush.bf16.msra.mxu0 %v717
  %730 = vmatpush.bf16.msra.mxu0 %v716
  %731 = vmatpush.bf16.msra.mxu0 %v715
  %732 = vmatpush.bf16.msra.mxu0 %v714
  %733 = vmatmul.bf16.gmra.mxu0 %v723
  %v734 = vpop.f32.mrf.mxu0
  %v735 = vadd.f32 %v696, %v734
  %v736 = vpop.f32.mrf.mxu0
  %737 = vdwg.mxu0
  %v738 = vmax.f32 %v735, 0.0
  %v739 = vpack.c.bf16 %v738, %v738
  %v740 = vld [vmem:[%s9] sm:$0xf]
  %v741 = vld [vmem:[%s9 + $0x4] sm:$0xf]
  %v742 = vld [vmem:[%s9 + $0x8] sm:$0xf]
  %v743 = vld [vmem:[%s9 + $0xc] sm:$0xf]
  %v744 = vld [vmem:[%s9 + $0x10] sm:$0xf]
  %v745 = vld [vmem:[%s9 + $0x14] sm:$0xf]
  %v746 = vld [vmem:[%s9 + $0x18] sm:$0xf]
  %v747 = vld [vmem:[%s9 + $0x1c] sm:$0xf]
  %v748 = vld [vmem:[%s9 + $0x20] sm:$0xf]
  %v749 = vld [vmem:[%s9 + $0x24] sm:$0xf]
  %v750 = vld [vmem:[%s9 + $0x28] sm:$0xf]
  %v751 = vld [vmem:[%s9 + $0x2c] sm:$0xf]
  %v752 = vld [vmem:[%s9 + $0x30] sm:$0xf]
  %v753 = vld [vmem:[%s9 + $0x34] sm:$0xf]
  %v754 = vld [vmem:[%s9 + $0x38] sm:$0xf]
  %v755 = vld [vmem:[%s9 + $0x3c] sm:$0xf]
  %v756 = vld [vmem:[%s10] sm:$0x1]
  %v758 = vperm.slane %v756, 0
  %v776 = vunpack.c.l.b16 %v740
  %v777 = vunpack.c.l.b16 %v741
  %v778 = vunpack.c.l.b16 %v742
  %v779 = vunpack.c.l.b16 %v743
  %v780 = vunpack.c.l.b16 %v744
  %v781 = vunpack.c.l.b16 %v745
  %v782 = vunpack.c.l.b16 %v746
  %v783 = vunpack.c.l.b16 %v747
  %v784 = vunpack.c.l.b16 %v748
  %v785 = vunpack.c.l.b16 %v749
  %v786 = vunpack.c.l.b16 %v750
  %v787 = vunpack.c.l.b16 %v751
  %v788 = vunpack.c.l.b16 %v752
  %v789 = vunpack.c.l.b16 %v753
  %v790 = vunpack.c.l.b16 %v754
  %v791 = vunpack.c.l.b16 %v755
  %v792 = vpack.c.b16 %v777, %v776
  %v793 = vpack.c.b16 %v779, %v778
  %v794 = vpack.c.b16 %v781, %v780
  %v795 = vpack.c.b16 %v783, %v782
  %v796 = vpack.c.b16 %v785, %v784
  %v797 = vpack.c.b16 %v787, %v786
  %v798 = vpack.c.b16 %v789, %v788
  %v799 = vpack.c.b16 %v791, %v790
  %808 = vmatpush.bf16.msra.mxu0 %v799
  %809 = vmatpush.bf16.msra.mxu0 %v798
  %810 = vmatpush.bf16.msra.mxu0 %v797
  %811 = vmatpush.bf16.msra.mxu0 %v796
  %812 = vmatpush.bf16.msra.mxu0 %v795
  %813 = vmatpush.bf16.msra.mxu0 %v794
  %814 = vmatpush.bf16.msra.mxu0 %v793
  %815 = vmatpush.bf16.msra.mxu0 %v792
  %816 = vmatmul.bf16.gmra.mxu0 %v739
  %v817 = vpop.f32.mrf.mxu0
  %v818 = vadd.f32 %v758, %v817
  %v819 = vpop.f32.mrf.mxu0
  %820 = vdwg.mxu0
  %v821 = vadd.f32 %v684, %v818
  %v822 = vld [vmem:[%s13] sm:$0x1]
  %v823 = vld [vmem:[%s14] sm:$0x1]
  %v824 = vsel %vm172, %v821, 0.0
  %825 = vadd.xlane.f32.xlu0 %v824
  %v826 = vpop.xlane.xlu0 %825
  %v827 = vmul.f32 %v826, %v657
  %v828 = vsub.f32 %v821, %v827
  %v829 = vmul.f32 %v828, %v828
  %v830 = vsel %vm172, %v829, 0.0
  %831 = vadd.xlane.f32.xlu0 %v830
  %v832 = vpop.xlane.xlu0 %831
  %v833 = vmul.f32 %v832, %v657
  %v834 = vadd.f32 %v833, 1e-05
  %v835 = vrsqrt.pop %v834
  %v836 = vmul.f32 %v835, %v834
  %v837 = vmul.f32 %v836, %v835
  %v838 = vmul.f32 0.5, %v837
  %v839 = vsub.f32 1.5, %v838
  %v840 = vmul.f32 %v835, %v839
  %vm841 = vweird.f32 %v834
  %vm842 = vweird.f32 %v835
  %vm843 = vmor %vm841, %vm842
  %v844 = vsel %vm843, %v835, %v840
  %v845 = vmul.f32 %v828, %v844
  %v847 = vperm.slane %v822, 0
  %v849 = vmul.f32 %v845, %v847
  %v851 = vperm.slane %v823, 0
  %v853 = vadd.f32 %v849, %v851
  %s854 = scalar_lea.vmem %s3, 128
  %v855 = vld [vmem:[%s854] sm:$0xf]
  %v856 = vld [vmem:[%s854 + $0x4] sm:$0xf]
  %v857 = vld [vmem:[%s854 + $0x8] sm:$0xf]
  %v858 = vld [vmem:[%s854 + $0xc] sm:$0xf]
  %v859 = vld [vmem:[%s854 + $0x10] sm:$0xf]
  %v860 = vld [vmem:[%s854 + $0x14] sm:$0xf]
  %v861 = vld [vmem:[%s854 + $0x18] sm:$0xf]
  %v862 = vld [vmem:[%s854 + $0x1c] sm:$0xf]
  %v863 = vld [vmem:[%s854 + $0x20] sm:$0xf]
  %v864 = vld [vmem:[%s854 + $0x24] sm:$0xf]
  %v865 = vld [vmem:[%s854 + $0x28] sm:$0xf]
  %v866 = vld [vmem:[%s854 + $0x2c] sm:$0xf]
  %v867 = vld [vmem:[%s854 + $0x30] sm:$0xf]
  %v868 = vld [vmem:[%s854 + $0x34] sm:$0xf]
  %v869 = vld [vmem:[%s854 + $0x38] sm:$0xf]
  %v870 = vld [vmem:[%s854 + $0x3c] sm:$0xf]
  %v871 = vld [vmem:[%s854 + $0x40] sm:$0xf]
  %v872 = vld [vmem:[%s854 + $0x44] sm:$0xf]
  %v873 = vld [vmem:[%s854 + $0x48] sm:$0xf]
  %v874 = vld [vmem:[%s854 + $0x4c] sm:$0xf]
  %v875 = vld [vmem:[%s854 + $0x50] sm:$0xf]
  %v876 = vld [vmem:[%s854 + $0x54] sm:$0xf]
  %v877 = vld [vmem:[%s854 + $0x58] sm:$0xf]
  %v878 = vld [vmem:[%s854 + $0x5c] sm:$0xf]
  %v879 = vld [vmem:[%s854 + $0x60] sm:$0xf]
  %v880 = vld [vmem:[%s854 + $0x64] sm:$0xf]
  %v881 = vld [vmem:[%s854 + $0x68] sm:$0xf]
  %v882 = vld [vmem:[%s854 + $0x6c] sm:$0xf]
  %v883 = vld [vmem:[%s854 + $0x70] sm:$0xf]
  %v884 = vld [vmem:[%s854 + $0x74] sm:$0xf]
  %v885 = vld [vmem:[%s854 + $0x78] sm:$0xf]
  %v886 = vld [vmem:[%s854 + $0x7c] sm:$0xf]
  %s887 = scalar_lea.vmem %s4, 4
  %v888 = vld [vmem:[%s887] sm:$0x1]
  %v889 = vld [vmem:[%s887 + $0x1] sm:$0x1]
  %v890 = vld [vmem:[%s887 + $0x2] sm:$0x1]
  %v891 = vld [vmem:[%s887 + $0x3] sm:$0x1]
  %s892 = scalar_lea.vmem %s5, 32
  %v893 = vld [vmem:[%s892] sm:$0xf]
  %v894 = vld [vmem:[%s892 + $0x4] sm:$0xf]
  %v895 = vld [vmem:[%s892 + $0x8] sm:$0xf]
  %v896 = vld [vmem:[%s892 + $0xc] sm:$0xf]
  %v897 = vld [vmem:[%s892 + $0x10] sm:$0xf]
  %v898 = vld [vmem:[%s892 + $0x14] sm:$0xf]
  %v899 = vld [vmem:[%s892 + $0x18] sm:$0xf]
  %v900 = vld [vmem:[%s892 + $0x1c] sm:$0xf]
  %s901 = scalar_lea.vmem %s6, 1
  %v902 = vld [vmem:[%s901] sm:$0x1]
  %v903 = vpack.c.bf16 %v853, %v853
  %v908 = vperm.slane %v888, 0
  %v909 = vperm.slane %v889, 0
  %v910 = vperm.slane %v890, 0
  %v911 = vperm.slane %v891, 0
  %v924 = vunpack.c.l.b16 %v855
  %v925 = vunpack.c.l.b16 %v856
  %v926 = vunpack.c.l.b16 %v857
  %v927 = vunpack.c.l.b16 %v858
  %v928 = vunpack.c.l.b16 %v859
  %v929 = vunpack.c.l.b16 %v860
  %v930 = vunpack.c.l.b16 %v861
  %v931 = vunpack.c.l.b16 %v862
  %v932 = vpack.c.b16 %v925, %v924
  %v933 = vpack.c.b16 %v927, %v926
  %v934 = vpack.c.b16 %v929, %v928
  %v935 = vpack.c.b16 %v931, %v930
  %v941 = vsel %vm172, %v903, 0
  %943 = vmatpush.bf16.msra.mxu0 0
  %944 = vmatpush.bf16.msra.mxu0 0
  %945 = vmatpush.bf16.msra.mxu0 0
  %946 = vmatpush.bf16.msra.mxu0 0
  %947 = vmatpush.bf16.msra.mxu0 %v935
  %948 = vmatpush.bf16.msra.mxu0 %v934
  %949 = vmatpush.bf16.msra.mxu0 %v933
  %950 = vmatpush.bf16.msra.mxu0 %v932
  %951 = vmatmul.bf16.gmra.mxu0 %v941
  %v952 = vpop.f32.mrf.mxu0
  %v953 = vadd.f32 %v908, %v952
  %v954 = vpop.f32.mrf.mxu0
  %955 = vdwg.mxu0
  %v964 = vunpack.c.l.b16 %v863
  %v965 = vunpack.c.l.b16 %v864
  %v966 = vunpack.c.l.b16 %v865
  %v967 = vunpack.c.l.b16 %v866
  %v968 = vunpack.c.l.b16 %v867
  %v969 = vunpack.c.l.b16 %v868
  %v970 = vunpack.c.l.b16 %v869
  %v971 = vunpack.c.l.b16 %v870
  %v972 = vpack.c.b16 %v965, %v964
  %v973 = vpack.c.b16 %v967, %v966
  %v974 = vpack.c.b16 %v969, %v968
  %v975 = vpack.c.b16 %v971, %v970
  %980 = vmatpush.bf16.msra.mxu0 0
  %981 = vmatpush.bf16.msra.mxu0 0
  %982 = vmatpush.bf16.msra.mxu0 0
  %983 = vmatpush.bf16.msra.mxu0 0
  %984 = vmatpush.bf16.msra.mxu0 %v975
  %985 = vmatpush.bf16.msra.mxu0 %v974
  %986 = vmatpush.bf16.msra.mxu0 %v973
  %987 = vmatpush.bf16.msra.mxu0 %v972
  %988 = vmatmul.bf16.gmra.mxu0 %v941
  %v989 = vpop.f32.mrf.mxu0
  %v990 = vadd.f32 %v909, %v989
  %v991 = vpop.f32.mrf.mxu0
  %992 = vdwg.mxu0
  %v1001 = vunpack.c.l.b16 %v871
  %v1002 = vunpack.c.l.b16 %v872
  %v1003 = vunpack.c.l.b16 %v873
  %v1004 = vunpack.c.l.b16 %v874
  %v1005 = vunpack.c.l.b16 %v875
  %v1006 = vunpack.c.l.b16 %v876
  %v1007 = vunpack.c.l.b16 %v877
  %v1008 = vunpack.c.l.b16 %v878
  %v1009 = vpack.c.b16 %v1002, %v1001
  %v1010 = vpack.c.b16 %v1004, %v1003
  %v1011 = vpack.c.b16 %v1006, %v1005
  %v1012 = vpack.c.b16 %v1008, %v1007
  %1017 = vmatpush.bf16.msra.mxu0 0
  %1018 = vmatpush.bf16.msra.mxu0 0
  %1019 = vmatpush.bf16.msra.mxu0 0
  %1020 = vmatpush.bf16.msra.mxu0 0
  %1021 = vmatpush.bf16.msra.mxu0 %v1012
  %1022 = vmatpush.bf16.msra.mxu0 %v1011
  %1023 = vmatpush.bf16.msra.mxu0 %v1010
  %1024 = vmatpush.bf16.msra.mxu0 %v1009
  %1025 = vmatmul.bf16.gmra.mxu0 %v941
  %v1026 = vpop.f32.mrf.mxu0
  %v1027 = vadd.f32 %v910, %v1026
  %v1028 = vpop.f32.mrf.mxu0
  %1029 = vdwg.mxu0
  %v1038 = vunpack.c.l.b16 %v879
  %v1039 = vunpack.c.l.b16 %v880
  %v1040 = vunpack.c.l.b16 %v881
  %v1041 = vunpack.c.l.b16 %v882
  %v1042 = vunpack.c.l.b16 %v883
  %v1043 = vunpack.c.l.b16 %v884
  %v1044 = vunpack.c.l.b16 %v885
  %v1045 = vunpack.c.l.b16 %v886
  %v1046 = vpack.c.b16 %v1039, %v1038
  %v1047 = vpack.c.b16 %v1041, %v1040
  %v1048 = vpack.c.b16 %v1043, %v1042
  %v1049 = vpack.c.b16 %v1045, %v1044
  %1054 = vmatpush.bf16.msra.mxu0 0
  %1055 = vmatpush.bf16.msra.mxu0 0
  %1056 = vmatpush.bf16.msra.mxu0 0
  %1057 = vmatpush.bf16.msra.mxu0 0
  %1058 = vmatpush.bf16.msra.mxu0 %v1049
  %1059 = vmatpush.bf16.msra.mxu0 %v1048
  %1060 = vmatpush.bf16.msra.mxu0 %v1047
  %1061 = vmatpush.bf16.msra.mxu0 %v1046
  %1062 = vmatmul.bf16.gmra.mxu0 %v941
  %v1063 = vpop.f32.mrf.mxu0
  %v1064 = vadd.f32 %v911, %v1063
  %v1065 = vpop.f32.mrf.mxu0
  %1066 = vdwg.mxu0
  %v1067 = vmul.f32 %v953, 0.25
  %v1068 = vmul.f32 %v990, 0.25
  %v1069 = vmul.f32 %v1027, 0.25
  %v1070 = vmul.f32 %v1064, 0.25
  %v1071 = vpack.c.bf16 %v1067, %v1067
  %v1072 = vpack.c.bf16 %v1068, %v1068
  %v1073 = vpack.c.bf16 %v1069, %v1069
  %v1074 = vpack.c.bf16 %v1070, %v1070
  %v1075 = vpack.c.bf16 %v953, %v953
  %v1076 = vpack.c.bf16 %v990, %v990
  %v1077 = vpack.c.bf16 %v1027, %v1027
  %v1078 = vpack.c.bf16 %v1064, %v1064
  %v1080 = vunpack.c.l.b16 %v1075
  %v1081 = vpack.c.b16 %v1080, %v1080
  %1082 = vrot.lane.b32.xlu0 %v1081, 112
  %v1083 = vpop.permute.xlu0 %1082
  %v1085 = vsel %vm73, %v1071, 0
  %v1088 = vsel %vm73, %v1083, 0
  %1090 = vmatpush.bf16.xpose.msra.mxu0 0
  %1091 = vmatpush.bf16.xpose.msra.mxu0 0
  %1092 = vmatpush.bf16.xpose.msra.mxu0 0
  %1093 = vmatpush.bf16.xpose.msra.mxu0 0
  %1094 = vmatpush.bf16.xpose.msra.mxu0 0
  %1095 = vmatpush.bf16.xpose.msra.mxu0 0
  %1096 = vmatpush.bf16.xpose.msra.mxu0 0
  %1097 = vmatpush.bf16.xpose.msra.mxu0 %v1088
  %1098 = vmatmul.bf16.gmra.mxu0 %v1085
  %v1099 = vpop.f32.mrf.mxu0
  %v1100 = vadd.f32 0.0, %v1099
  %v1101 = vpop.f32.mrf.mxu0
  %1102 = vdwg.mxu0
  %v1104 = vunpack.c.l.b16 %v1076
  %v1105 = vpack.c.b16 %v1104, %v1104
  %1106 = vrot.lane.b32.xlu0 %v1105, 112
  %v1107 = vpop.permute.xlu0 %1106
  %v1109 = vsel %vm73, %v1072, 0
  %v1112 = vsel %vm73, %v1107, 0
  %1114 = vmatpush.bf16.xpose.msra.mxu0 0
  %1115 = vmatpush.bf16.xpose.msra.mxu0 0
  %1116 = vmatpush.bf16.xpose.msra.mxu0 0
  %1117 = vmatpush.bf16.xpose.msra.mxu0 0
  %1118 = vmatpush.bf16.xpose.msra.mxu0 0
  %1119 = vmatpush.bf16.xpose.msra.mxu0 0
  %1120 = vmatpush.bf16.xpose.msra.mxu0 0
  %1121 = vmatpush.bf16.xpose.msra.mxu0 %v1112
  %1122 = vmatmul.bf16.gmra.mxu0 %v1109
  %v1123 = vpop.f32.mrf.mxu0
  %v1124 = vadd.f32 0.0, %v1123
  %v1125 = vpop.f32.mrf.mxu0
  %1126 = vdwg.mxu0
  %v1128 = vunpack.c.l.b16 %v1077
  %v1129 = vpack.c.b16 %v1128, %v1128
  %1130 = vrot.lane.b32.xlu0 %v1129, 112
  %v1131 = vpop.permute.xlu0 %1130
  %v1133 = vsel %vm73, %v1073, 0
  %v1136 = vsel %vm73, %v1131, 0
  %1138 = vmatpush.bf16.xpose.msra.mxu0 0
  %1139 = vmatpush.bf16.xpose.msra.mxu0 0
  %1140 = vmatpush.bf16.xpose.msra.mxu0 0
  %1141 = vmatpush.bf16.xpose.msra.mxu0 0
  %1142 = vmatpush.bf16.xpose.msra.mxu0 0
  %1143 = vmatpush.bf16.xpose.msra.mxu0 0
  %1144 = vmatpush.bf16.xpose.msra.mxu0 0
  %1145 = vmatpush.bf16.xpose.msra.mxu0 %v1136
  %1146 = vmatmul.bf16.gmra.mxu0 %v1133
  %v1147 = vpop.f32.mrf.mxu0
  %v1148 = vadd.f32 0.0, %v1147
  %v1149 = vpop.f32.mrf.mxu0
  %1150 = vdwg.mxu0
  %v1152 = vunpack.c.l.b16 %v1078
  %v1153 = vpack.c.b16 %v1152, %v1152
  %1154 = vrot.lane.b32.xlu0 %v1153, 112
  %v1155 = vpop.permute.xlu0 %1154
  %v1157 = vsel %vm73, %v1074, 0
  %v1160 = vsel %vm73, %v1155, 0
  %1162 = vmatpush.bf16.xpose.msra.mxu0 0
  %1163 = vmatpush.bf16.xpose.msra.mxu0 0
  %1164 = vmatpush.bf16.xpose.msra.mxu0 0
  %1165 = vmatpush.bf16.xpose.msra.mxu0 0
  %1166 = vmatpush.bf16.xpose.msra.mxu0 0
  %1167 = vmatpush.bf16.xpose.msra.mxu0 0
  %1168 = vmatpush.bf16.xpose.msra.mxu0 0
  %1169 = vmatpush.bf16.xpose.msra.mxu0 %v1160
  %1170 = vmatmul.bf16.gmra.mxu0 %v1157
  %v1171 = vpop.f32.mrf.mxu0
  %v1172 = vadd.f32 0.0, %v1171
  %v1173 = vpop.f32.mrf.mxu0
  %1174 = vdwg.mxu0
  %v1175 = vsel %vm408, %v1100, -inf
  %1176 = vmax.xlane.f32.xlu0 %v1175
  %v1177 = vpop.xlane.xlu0 %1176
  %v1178 = vsel %vm408, %v1124, -inf
  %1179 = vmax.xlane.f32.xlu0 %v1178
  %v1180 = vpop.xlane.xlu0 %1179
  %v1181 = vsel %vm408, %v1148, -inf
  %1182 = vmax.xlane.f32.xlu0 %v1181
  %v1183 = vpop.xlane.xlu0 %1182
  %v1184 = vsel %vm408, %v1172, -inf
  %1185 = vmax.xlane.f32.xlu0 %v1184
  %v1186 = vpop.xlane.xlu0 %1185
  %v1187 = vsub.f32 %v1100, %v1177
  %v1188 = vsub.f32 %v1124, %v1180
  %v1189 = vsub.f32 %v1148, %v1183
  %v1190 = vsub.f32 %v1172, %v1186
  %v1191 = vmul.f32 %v1187, 1.442695
  %v1192 = vpow.pop %v1191
  %v1193 = vmul.f32 %v1188, 1.442695
  %v1194 = vpow.pop %v1193
  %v1195 = vmul.f32 %v1189, 1.442695
  %v1196 = vpow.pop %v1195
  %v1197 = vmul.f32 %v1190, 1.442695
  %v1198 = vpow.pop %v1197
  %v1199 = vsel %vm408, %v1192, 0.0
  %1200 = vadd.xlane.f32.xlu0 %v1199
  %v1201 = vpop.xlane.xlu0 %1200
  %v1202 = vsel %vm408, %v1194, 0.0
  %1203 = vadd.xlane.f32.xlu0 %v1202
  %v1204 = vpop.xlane.xlu0 %1203
  %v1205 = vsel %vm408, %v1196, 0.0
  %1206 = vadd.xlane.f32.xlu0 %v1205
  %v1207 = vpop.xlane.xlu0 %1206
  %v1208 = vsel %vm408, %v1198, 0.0
  %1209 = vadd.xlane.f32.xlu0 %v1208
  %v1210 = vpop.xlane.xlu0 %1209
  %v1211 = vrcp.pop %v1201
  %v1212 = vrcp.pop %v1204
  %v1213 = vrcp.pop %v1207
  %v1214 = vrcp.pop %v1210
  %v1215 = vmul.f32 %v1192, %v1211
  %v1216 = vmul.f32 %v1194, %v1212
  %v1217 = vmul.f32 %v1196, %v1213
  %v1218 = vmul.f32 %v1198, %v1214
  %v1219 = vpack.c.bf16 %v1215, %v1215
  %v1220 = vpack.c.bf16 %v1216, %v1216
  %v1221 = vpack.c.bf16 %v1217, %v1217
  %v1222 = vpack.c.bf16 %v1218, %v1218
  %1223 = vrot.lane.b32.xlu0 %v1081, 96
  %v1224 = vpop.permute.xlu0 %1223
  %v1226 = vsel %vm408, %v1219, 0
  %v1229 = vsel %vm462, %v1224, 0
  %1231 = vmatpush.bf16.msra.mxu0 0
  %1232 = vmatpush.bf16.msra.mxu0 0
  %1233 = vmatpush.bf16.msra.mxu0 0
  %1234 = vmatpush.bf16.msra.mxu0 0
  %1235 = vmatpush.bf16.msra.mxu0 0
  %1236 = vmatpush.bf16.msra.mxu0 0
  %1237 = vmatpush.bf16.msra.mxu0 0
  %1238 = vmatpush.bf16.msra.mxu0 %v1229
  %1239 = vmatmul.bf16.gmra.mxu0 %v1226
  %v1240 = vpop.f32.mrf.mxu0
  %v1241 = vadd.f32 0.0, %v1240
  %v1242 = vpop.f32.mrf.mxu0
  %1243 = vdwg.mxu0
  %1244 = vrot.lane.b32.xlu0 %v1105, 96
  %v1245 = vpop.permute.xlu0 %1244
  %v1247 = vsel %vm408, %v1220, 0
  %v1250 = vsel %vm462, %v1245, 0
  %1252 = vmatpush.bf16.msra.mxu0 0
  %1253 = vmatpush.bf16.msra.mxu0 0
  %1254 = vmatpush.bf16.msra.mxu0 0
  %1255 = vmatpush.bf16.msra.mxu0 0
  %1256 = vmatpush.bf16.msra.mxu0 0
  %1257 = vmatpush.bf16.msra.mxu0 0
  %1258 = vmatpush.bf16.msra.mxu0 0
  %1259 = vmatpush.bf16.msra.mxu0 %v1250
  %1260 = vmatmul.bf16.gmra.mxu0 %v1247
  %v1261 = vpop.f32.mrf.mxu0
  %v1262 = vadd.f32 0.0, %v1261
  %v1263 = vpop.f32.mrf.mxu0
  %1264 = vdwg.mxu0
  %1265 = vrot.lane.b32.xlu0 %v1129, 96
  %v1266 = vpop.permute.xlu0 %1265
  %v1268 = vsel %vm408, %v1221, 0
  %v1271 = vsel %vm462, %v1266, 0
  %1273 = vmatpush.bf16.msra.mxu0 0
  %1274 = vmatpush.bf16.msra.mxu0 0
  %1275 = vmatpush.bf16.msra.mxu0 0
  %1276 = vmatpush.bf16.msra.mxu0 0
  %1277 = vmatpush.bf16.msra.mxu0 0
  %1278 = vmatpush.bf16.msra.mxu0 0
  %1279 = vmatpush.bf16.msra.mxu0 0
  %1280 = vmatpush.bf16.msra.mxu0 %v1271
  %1281 = vmatmul.bf16.gmra.mxu0 %v1268
  %v1282 = vpop.f32.mrf.mxu0
  %v1283 = vadd.f32 0.0, %v1282
  %v1284 = vpop.f32.mrf.mxu0
  %1285 = vdwg.mxu0
  %1286 = vrot.lane.b32.xlu0 %v1153, 96
  %v1287 = vpop.permute.xlu0 %1286
  %v1289 = vsel %vm408, %v1222, 0
  %v1292 = vsel %vm462, %v1287, 0
  %1294 = vmatpush.bf16.msra.mxu0 0
  %1295 = vmatpush.bf16.msra.mxu0 0
  %1296 = vmatpush.bf16.msra.mxu0 0
  %1297 = vmatpush.bf16.msra.mxu0 0
  %1298 = vmatpush.bf16.msra.mxu0 0
  %1299 = vmatpush.bf16.msra.mxu0 0
  %1300 = vmatpush.bf16.msra.mxu0 0
  %1301 = vmatpush.bf16.msra.mxu0 %v1292
  %1302 = vmatmul.bf16.gmra.mxu0 %v1289
  %v1303 = vpop.f32.mrf.mxu0
  %v1304 = vadd.f32 0.0, %v1303
  %v1305 = vpop.f32.mrf.mxu0
  %1306 = vdwg.mxu0
  %v1307 = vpack.c.bf16 %v1241, %v1241
  %v1308 = vpack.c.bf16 %v1262, %v1262
  %v1309 = vpack.c.bf16 %v1283, %v1283
  %v1310 = vpack.c.bf16 %v1304, %v1304
  %v1313 = vunpack.c.l.b16 %v893
  %v1314 = vunpack.c.l.b16 %v894
  %v1315 = vpack.c.b16 %v1314, %v1313
  %v1318 = vsel %vm73, %v1307, 0
  %1320 = vmatpush.bf16.msra.mxu0 0
  %1321 = vmatpush.bf16.msra.mxu0 0
  %1322 = vmatpush.bf16.msra.mxu0 0
  %1323 = vmatpush.bf16.msra.mxu0 0
  %1324 = vmatpush.bf16.msra.mxu0 0
  %1325 = vmatpush.bf16.msra.mxu0 0
  %1326 = vmatpush.bf16.msra.mxu0 0
  %1327 = vmatpush.bf16.msra.mxu0 %v1315
  %1328 = vmatmul.bf16.gmra.mxu0 %v1318
  %v1329 = vpop.f32.mrf.mxu0
  %v1330 = vadd.f32 0.0, %v1329
  %v1331 = vpop.f32.mrf.mxu0
  %1332 = vdwg.mxu0
  %v1335 = vunpack.c.l.b16 %v895
  %v1336 = vunpack.c.l.b16 %v896
  %v1337 = vpack.c.b16 %v1336, %v1335
  %v1340 = vsel %vm73, %v1308, 0
  %1342 = vmatpush.bf16.msra.mxu0 0
  %1343 = vmatpush.bf16.msra.mxu0 0
  %1344 = vmatpush.bf16.msra.mxu0 0
  %1345 = vmatpush.bf16.msra.mxu0 0
  %1346 = vmatpush.bf16.msra.mxu0 0
  %1347 = vmatpush.bf16.msra.mxu0 0
  %1348 = vmatpush.bf16.msra.mxu0 0
  %1349 = vmatpush.bf16.msra.mxu0 %v1337
  %1350 = vmatmul.bf16.gmra.mxu0 %v1340
  %v1351 = vpop.f32.mrf.mxu0
  %v1352 = vadd.f32 0.0, %v1351
  %v1353 = vpop.f32.mrf.mxu0
  %1354 = vdwg.mxu0
  %v1357 = vunpack.c.l.b16 %v897
  %v1358 = vunpack.c.l.b16 %v898
  %v1359 = vpack.c.b16 %v1358, %v1357
  %v1362 = vsel %vm73, %v1309, 0
  %1364 = vmatpush.bf16.msra.mxu0 0
  %1365 = vmatpush.bf16.msra.mxu0 0
  %1366 = vmatpush.bf16.msra.mxu0 0
  %1367 = vmatpush.bf16.msra.mxu0 0
  %1368 = vmatpush.bf16.msra.mxu0 0
  %1369 = vmatpush.bf16.msra.mxu0 0
  %1370 = vmatpush.bf16.msra.mxu0 0
  %1371 = vmatpush.bf16.msra.mxu0 %v1359
  %1372 = vmatmul.bf16.gmra.mxu0 %v1362
  %v1373 = vpop.f32.mrf.mxu0
  %v1374 = vadd.f32 0.0, %v1373
  %v1375 = vpop.f32.mrf.mxu0
  %1376 = vdwg.mxu0
  %v1379 = vunpack.c.l.b16 %v899
  %v1380 = vunpack.c.l.b16 %v900
  %v1381 = vpack.c.b16 %v1380, %v1379
  %v1384 = vsel %vm73, %v1310, 0
  %1386 = vmatpush.bf16.msra.mxu0 0
  %1387 = vmatpush.bf16.msra.mxu0 0
  %1388 = vmatpush.bf16.msra.mxu0 0
  %1389 = vmatpush.bf16.msra.mxu0 0
  %1390 = vmatpush.bf16.msra.mxu0 0
  %1391 = vmatpush.bf16.msra.mxu0 0
  %1392 = vmatpush.bf16.msra.mxu0 0
  %1393 = vmatpush.bf16.msra.mxu0 %v1381
  %1394 = vmatmul.bf16.gmra.mxu0 %v1384
  %v1395 = vpop.f32.mrf.mxu0
  %v1396 = vadd.f32 0.0, %v1395
  %v1397 = vpop.f32.mrf.mxu0
  %1398 = vdwg.mxu0
  %v1399 = vsel %vm172, %v1330, 0.0
  %v1400 = vsel %vm172, %v1352, 0.0
  %v1401 = vadd.f32 %v1399, %v1400
  %v1402 = vsel %vm172, %v1374, 0.0
  %v1403 = vadd.f32 %v1401, %v1402
  %v1404 = vsel %vm172, %v1396, 0.0
  %v1405 = vadd.f32 %v1403, %v1404
  %v1407 = vperm.slane %v902, 0
  %v1409 = vadd.f32 %v1405, %v1407
  %v1410 = vadd.f32 %v853, %v1409
  %s1411 = scalar_lea.vmem %s11, 1
  %v1412 = vld [vmem:[%s1411] sm:$0x1]
  %s1413 = scalar_lea.vmem %s12, 1
  %v1414 = vld [vmem:[%s1413] sm:$0x1]
  %v1415 = vsel %vm172, %v1410, 0.0
  %1416 = vadd.xlane.f32.xlu0 %v1415
  %v1417 = vpop.xlane.xlu0 %1416
  %v1418 = vmul.f32 %v1417, %v657
  %v1419 = vsub.f32 %v1410, %v1418
  %v1420 = vmul.f32 %v1419, %v1419
  %v1421 = vsel %vm172, %v1420, 0.0
  %1422 = vadd.xlane.f32.xlu0 %v1421
  %v1423 = vpop.xlane.xlu0 %1422
  %v1424 = vmul.f32 %v1423, %v657
  %v1425 = vadd.f32 %v1424, 1e-05
  %v1426 = vrsqrt.pop %v1425
  %v1427 = vmul.f32 %v1426, %v1425
  %v1428 = vmul.f32 %v1427, %v1426
  %v1429 = vmul.f32 0.5, %v1428
  %v1430 = vsub.f32 1.5, %v1429
  %v1431 = vmul.f32 %v1426, %v1430
  %vm1432 = vweird.f32 %v1425
  %vm1433 = vweird.f32 %v1426
  %vm1434 = vmor %vm1432, %vm1433
  %v1435 = vsel %vm1434, %v1426, %v1431
  %v1436 = vmul.f32 %v1419, %v1435
  %v1438 = vperm.slane %v1412, 0
  %v1440 = vmul.f32 %v1436, %v1438
  %v1442 = vperm.slane %v1414, 0
  %v1444 = vadd.f32 %v1440, %v1442
  %v1445 = vpack.c.bf16 %v1444, %v1444
  %s1446 = scalar_lea.vmem %s7, 32
  %v1447 = vld [vmem:[%s1446] sm:$0xf]
  %v1448 = vld [vmem:[%s1446 + $0x4] sm:$0xf]
  %v1449 = vld [vmem:[%s1446 + $0x8] sm:$0xf]
  %v1450 = vld [vmem:[%s1446 + $0xc] sm:$0xf]
  %v1451 = vld [vmem:[%s1446 + $0x10] sm:$0xf]
  %v1452 = vld [vmem:[%s1446 + $0x14] sm:$0xf]
  %v1453 = vld [vmem:[%s1446 + $0x18] sm:$0xf]
  %v1454 = vld [vmem:[%s1446 + $0x1c] sm:$0xf]
  %s1455 = scalar_lea.vmem %s8, 1
  %v1456 = vld [vmem:[%s1455] sm:$0x1]
  %v1458 = vperm.slane %v1456, 0
  %v1468 = vunpack.c.l.b16 %v1447
  %v1469 = vunpack.c.l.b16 %v1448
  %v1470 = vunpack.c.l.b16 %v1449
  %v1471 = vunpack.c.l.b16 %v1450
  %v1472 = vunpack.c.l.b16 %v1451
  %v1473 = vunpack.c.l.b16 %v1452
  %v1474 = vunpack.c.l.b16 %v1453
  %v1475 = vunpack.c.l.b16 %v1454
  %v1476 = vpack.c.b16 %v1469, %v1468
  %v1477 = vpack.c.b16 %v1471, %v1470
  %v1478 = vpack.c.b16 %v1473, %v1472
  %v1479 = vpack.c.b16 %v1475, %v1474
  %v1485 = vsel %vm172, %v1445, 0
  %1487 = vmatpush.bf16.msra.mxu0 0
  %1488 = vmatpush.bf16.msra.mxu0 0
  %1489 = vmatpush.bf16.msra.mxu0 0
  %1490 = vmatpush.bf16.msra.mxu0 0
  %1491 = vmatpush.bf16.msra.mxu0 %v1479
  %1492 = vmatpush.bf16.msra.mxu0 %v1478
  %1493 = vmatpush.bf16.msra.mxu0 %v1477
  %1494 = vmatpush.bf16.msra.mxu0 %v1476
  %1495 = vmatmul.bf16.gmra.mxu0 %v1485
  %v1496 = vpop.f32.mrf.mxu0
  %v1497 = vadd.f32 %v1458, %v1496
  %v1498 = vpop.f32.mrf.mxu0
  %1499 = vdwg.mxu0
  %v1500 = vmax.f32 %v1497, 0.0
  %v1501 = vpack.c.bf16 %v1500, %v1500
  %s1502 = scalar_lea.vmem %s9, 64
  %v1503 = vld [vmem:[%s1502] sm:$0xf]
  %v1504 = vld [vmem:[%s1502 + $0x4] sm:$0xf]
  %v1505 = vld [vmem:[%s1502 + $0x8] sm:$0xf]
  %v1506 = vld [vmem:[%s1502 + $0xc] sm:$0xf]
  %v1507 = vld [vmem:[%s1502 + $0x10] sm:$0xf]
  %v1508 = vld [vmem:[%s1502 + $0x14] sm:$0xf]
  %v1509 = vld [vmem:[%s1502 + $0x18] sm:$0xf]
  %v1510 = vld [vmem:[%s1502 + $0x1c] sm:$0xf]
  %v1511 = vld [vmem:[%s1502 + $0x20] sm:$0xf]
  %v1512 = vld [vmem:[%s1502 + $0x24] sm:$0xf]
  %v1513 = vld [vmem:[%s1502 + $0x28] sm:$0xf]
  %v1514 = vld [vmem:[%s1502 + $0x2c] sm:$0xf]
  %v1515 = vld [vmem:[%s1502 + $0x30] sm:$0xf]
  %v1516 = vld [vmem:[%s1502 + $0x34] sm:$0xf]
  %v1517 = vld [vmem:[%s1502 + $0x38] sm:$0xf]
  %v1518 = vld [vmem:[%s1502 + $0x3c] sm:$0xf]
  %s1519 = scalar_lea.vmem %s10, 1
  %v1520 = vld [vmem:[%s1519] sm:$0x1]
  %v1522 = vperm.slane %v1520, 0
  %v1540 = vunpack.c.l.b16 %v1503
  %v1541 = vunpack.c.l.b16 %v1504
  %v1542 = vunpack.c.l.b16 %v1505
  %v1543 = vunpack.c.l.b16 %v1506
  %v1544 = vunpack.c.l.b16 %v1507
  %v1545 = vunpack.c.l.b16 %v1508
  %v1546 = vunpack.c.l.b16 %v1509
  %v1547 = vunpack.c.l.b16 %v1510
  %v1548 = vunpack.c.l.b16 %v1511
  %v1549 = vunpack.c.l.b16 %v1512
  %v1550 = vunpack.c.l.b16 %v1513
  %v1551 = vunpack.c.l.b16 %v1514
  %v1552 = vunpack.c.l.b16 %v1515
  %v1553 = vunpack.c.l.b16 %v1516
  %v1554 = vunpack.c.l.b16 %v1517
  %v1555 = vunpack.c.l.b16 %v1518
  %v1556 = vpack.c.b16 %v1541, %v1540
  %v1557 = vpack.c.b16 %v1543, %v1542
  %v1558 = vpack.c.b16 %v1545, %v1544
  %v1559 = vpack.c.b16 %v1547, %v1546
  %v1560 = vpack.c.b16 %v1549, %v1548
  %v1561 = vpack.c.b16 %v1551, %v1550
  %v1562 = vpack.c.b16 %v1553, %v1552
  %v1563 = vpack.c.b16 %v1555, %v1554
  %1572 = vmatpush.bf16.msra.mxu0 %v1563
  %1573 = vmatpush.bf16.msra.mxu0 %v1562
  %1574 = vmatpush.bf16.msra.mxu0 %v1561
  %1575 = vmatpush.bf16.msra.mxu0 %v1560
  %1576 = vmatpush.bf16.msra.mxu0 %v1559
  %1577 = vmatpush.bf16.msra.mxu0 %v1558
  %1578 = vmatpush.bf16.msra.mxu0 %v1557
  %1579 = vmatpush.bf16.msra.mxu0 %v1556
  %1580 = vmatmul.bf16.gmra.mxu0 %v1501
  %v1581 = vpop.f32.mrf.mxu0
  %v1582 = vadd.f32 %v1522, %v1581
  %v1583 = vpop.f32.mrf.mxu0
  %1584 = vdwg.mxu0
  %v1585 = vadd.f32 %v1444, %v1582
  %s1586 = scalar_lea.vmem %s13, 1
  %v1587 = vld [vmem:[%s1586] sm:$0x1]
  %s1588 = scalar_lea.vmem %s14, 1
  %v1589 = vld [vmem:[%s1588] sm:$0x1]
  %v1590 = vsel %vm172, %v1585, 0.0
  %1591 = vadd.xlane.f32.xlu0 %v1590
  %v1592 = vpop.xlane.xlu0 %1591
  %v1593 = vmul.f32 %v1592, %v657
  %v1594 = vsub.f32 %v1585, %v1593
  %v1595 = vmul.f32 %v1594, %v1594
  %v1596 = vsel %vm172, %v1595, 0.0
  %1597 = vadd.xlane.f32.xlu0 %v1596
  %v1598 = vpop.xlane.xlu0 %1597
  %v1599 = vmul.f32 %v1598, %v657
  %v1600 = vadd.f32 %v1599, 1e-05
  %v1601 = vrsqrt.pop %v1600
  %v1602 = vmul.f32 %v1601, %v1600
  %v1603 = vmul.f32 %v1602, %v1601
  %v1604 = vmul.f32 0.5, %v1603
  %v1605 = vsub.f32 1.5, %v1604
  %v1606 = vmul.f32 %v1601, %v1605
  %vm1607 = vweird.f32 %v1600
  %vm1608 = vweird.f32 %v1601
  %vm1609 = vmor %vm1607, %vm1608
  %v1610 = vsel %vm1609, %v1601, %v1606
  %v1611 = vmul.f32 %v1594, %v1610
  %v1613 = vperm.slane %v1587, 0
  %v1615 = vmul.f32 %v1611, %v1613
  %v1617 = vperm.slane %v1589, 0
  %v1619 = vadd.f32 %v1615, %v1617
  %v1620 = vld [vmem:[%s15] sm:$0x1]
  %v1622 = vperm.slane %v1620, 0
  %v1624 = vmul.f32 %v1619, %v1622
  %v1625 = vsel %vm172, %v1624, 0.0
  %1626 = vadd.xlane.f32.xlu0 %v1625
  %v1627 = vpop.xlane.xlu0 %1626
  %v1628 = vld [vmem:[#allocation2] sm:$0x1]
  %v1630 = vperm.slane %v1628, 0
  %v1632 = vadd.f32 %v1627, %v1630
  %vm1633 = vcmask 7168
  %1634 = vst.msk [vmem:[%s17] sm:$0xff] %vm1633, %v1632
  // Predicated region
  $region70: #{tpu_custom_call.1} parent=0 // pred_check
    _
  $region71: #{tpu_custom_call.1} parent=0 // pred_check_branch
    %1636 = sbr.rel (0) target = $region73
  $region72: #{tpu_custom_call.1} parent=0 // pred_region
    _
  $region73: #{tpu_custom_call.1} parent=0 // pred_fallthru
    _
  // Predicated region
  $region74: #{tpu_custom_call.1} parent=0 // pred_check
    _
  $region75: #{tpu_custom_call.1} parent=0 // pred_check_branch
    %1638 = sbr.rel (0) target = $region77
  $region76: #{tpu_custom_call.1} parent=0 // pred_region
    _
  $region77: #{tpu_custom_call.1} parent=0 // pred_fallthru
    _

</llo_original>
